<compile_context>
chip_gen: v7x
topology: tpu7x:2x2x1
jax: 0.10.0
libtpu: 0.0.40
codegen_flags: <defaults>
</compile_context>

<pallas_src>
import functools
import math

import jax
import jax.numpy as jnp
from jax import lax
from jax.experimental import pallas as pl
from jax.experimental.pallas import tpu as pltpu


def _cost_volume_kernel(depth_ref, ref_ref, look_ref, coef_ref, cost_ref,
                        corr_ref, *, height, width, num_depth,
                        scale_over_views):
    b = pl.program_id(0)
    v = pl.program_id(2)
    num_views = pl.num_programs(2)
    tile_p = cost_ref.shape[-1]

    # Zero the resident output block once per (b, pixel-tile); it is
    # accumulated across the whole view sweep and written back to HBM only
    # when the (b, pt) block index changes.
    @pl.when(v == 0)
    def _init():
        cost_ref[...] = jnp.zeros_like(cost_ref)

    # ---- depth-independent channel contraction (one MXU matmul per view).
    # lookup stays lane-dense [C, HW]; contraction over dim 0 (trans_a form)
    # avoids a wrapper transpose and lane-padding of the small C axis.
    corr_ref[...] = lax.dot_general(
        look_ref[0, 0], ref_ref[0],
        dimension_numbers=(((0,), (0,)), ((), ())),
        preferred_element_type=jnp.float32)                 # [HW, TILE_P] f32

    # ---- hoisted out of the depth loop.
    coef = coef_ref[0, 0]                                    # [8, TILE_P] f32
    coefA = coef[0:4, :]                                     # proj[:3,:3] @ [x,y,1]
    coefT = coef[4:8, :]                                     # proj[:3, 3]
    w_iota = lax.broadcasted_iota(jnp.int32, (width, tile_p), 0)
    wn = width / 2.0
    hn = height / 2.0

    @pl.loop(0, num_depth)
    def _depth(d):
        depth = depth_ref[b, d]                              # scalar f32 (SMEM)

        # Projection of the pixel tile at this depth bin.
        P = depth * coefA + coefT                            # [4, TILE_P] (row 3 unused)
        z = P[2:3, :] + 1e-8
        # Exact reciprocal: the grid_normlize "force to 2.0" threshold is a
        # hard discontinuity, keep the projective divide bit-matched.
        rz = 1.0 / z
        px = P[0:1, :] * rz                                  # [1, TILE_P]
        py = P[1:2, :] * rz

        # grid_normlize: map to [-1, 1], force out-of-range coords to 2.0.
        gx = (px - wn) / wn
        gy = (py - hn) / hn
        gx = jnp.where((gx > 1.0) | (gx < -1.0), 2.0, gx)
        gy = jnp.where((gy > 1.0) | (gy < -1.0), 2.0, gy)

        # F.grid_sample: bilinear, align_corners=True, padding_mode='zeros'.
        ix = (gx + 1.0) * 0.5 * (width - 1)
        iy = (gy + 1.0) * 0.5 * (height - 1)
        x0f = jnp.floor(ix)
        y0f = jnp.floor(iy)
        wx1 = ix - x0f
        wx0 = 1.0 - wx1
        wy1 = iy - y0f
        wy0 = 1.0 - wy1
        x0 = x0f.astype(jnp.int32)
        y0 = y0f.astype(jnp.int32)
        x1 = x0 + 1
        y1 = y0 + 1
        # Out-of-range corners never match the one-hot index compare below,
        # so they contribute exactly 0 (== padding_mode='zeros').

        # ---- separable bilinear pick.
        # y-pass: stream Corr one source-row block [W, TILE_P] at a time.
        def y_body(h, s):
            wy = (jnp.where(h == y0, wy0, 0.0) +
                  jnp.where(h == y1, wy1, 0.0))              # [1, TILE_P]
            start = pl.multiple_of(h * width, width)
            return s + wy * corr_ref[pl.ds(start, width), :]

        s = lax.fori_loop(0, height, y_body,
                          jnp.zeros((width, tile_p), jnp.float32),
                          unroll=(height <= 32))             # [W, TILE_P]

        # x-pass on the small [W, TILE_P] intermediate.
        wx = (jnp.where(w_iota == x0, wx0, 0.0) +
              jnp.where(w_iota == x1, wx1, 0.0))             # [W, TILE_P]
        row = jnp.sum(s * wx, axis=0, keepdims=True)         # [1, TILE_P]

        sl = pl.ds(d, 1)
        cost_ref[0, sl, :] = cost_ref[0, sl, :] + row

    @pl.when(v == num_views - 1)
    def _finalize():
        cost_ref[...] = cost_ref[...] * scale_over_views


def _build_projection_coeffs(relative_poses, Ks_src, invK_ref, height, width):
    """A[b,v,:,p] = proj[:3,:3] @ [x_p, y_p, 1];  t[b,v,:] = proj[:3,3]."""
    proj = jnp.einsum('bvij,bvjk,bkl->bvil',
                      Ks_src.astype(jnp.float32),
                      relative_poses.astype(jnp.float32),
                      invK_ref.astype(jnp.float32))
    hw = height * width
    ys, xs = jnp.meshgrid(jnp.arange(height, dtype=jnp.float32),
                          jnp.arange(width, dtype=jnp.float32), indexing='ij')
    xy = jnp.stack([xs.reshape(-1), ys.reshape(-1),
                    jnp.ones((hw,), jnp.float32)], axis=0)          # [3, HW]
    A = jnp.einsum('bvij,jp->bvip', proj[:, :, :3, :3], xy)         # [B,V,3,HW]
    t = proj[:, :, :3, 3]                                           # [B,V,3]
    return A, t


def _vmem_capacity_bytes():
    try:
        return int(pltpu.get_tpu_info().vmem_capacity_bytes)
    except Exception:
        return 64 * 1024 * 1024     # conservative (v7x per-TC)


def _vmem_bytes_needed(hw, tile_p, channels, num_depth, feat_bytes=2):
    corr = hw * tile_p * 4                       # Corr scratch (f32)
    look = 2 * channels * hw * feat_bytes        # double-buffered lookup block
    ref = 2 * channels * tile_p * feat_bytes     # double-buffered ref block
    coef = 2 * 8 * tile_p * 4                    # double-buffered coeff block
    out = 2 * num_depth * tile_p * 4             # double-buffered output block
    return corr + look + ref + coef + out


def _pick_pixel_tile(hw, channels, num_depth, batch, vmem_budget,
                     max_tile=2048):
    """Largest multiple-of-128 divisor of hw that fits the VMEM budget; split
    further if needed so B*n_tiles >= 2 (keeps both v7x TensorCores busy)."""
    cands = [hw]
    if hw % 128 == 0:
        t = (min(max_tile, hw) // 128) * 128
        while t >= 128:
            if hw % t == 0:
                cands.append(t)
            t -= 128
    cands = sorted(set(cands), reverse=True)
    fits = [t for t in cands
            if _vmem_bytes_needed(hw, t, channels, num_depth) <= vmem_budget]
    chosen = fits[0] if fits else cands[-1]
    if batch * (hw // chosen) < 2:
        smaller = [t for t in fits if t < chosen and batch * (hw // t) >= 2]
        if smaller:
            chosen = smaller[0]
    return chosen


def match_features_fst_forward(depth_bins, ref_feat, lookup_feats,
                               relative_poses, Ks_src, invK_ref,
                               tile_p=None, feature_dtype=jnp.bfloat16):
    B, C, H, W = ref_feat.shape
    V = lookup_feats.shape[1]
    D = depth_bins.shape[1]
    HW = H * W
    scale = float(C) ** (-1.0)

    capacity = _vmem_capacity_bytes()
    budget = (capacity * 3) // 8
    if tile_p is None:
        tile_p = _pick_pixel_tile(HW, C, D, B, budget)
    assert HW % tile_p == 0 and (tile_p == HW or tile_p % 128 == 0)
    n_tiles = HW // tile_p
    need = _vmem_bytes_needed(HW, tile_p, C, D)
    vmem_limit = int(min(capacity, max(need + (8 << 20), 32 << 20)))

    # proj = K_src @ relative_pose @ invK_ref -> per-pixel linear coefficients
    A, t = _build_projection_coeffs(relative_poses, Ks_src, invK_ref, H, W)
    tb = jnp.broadcast_to(t[:, :, :, None], (B, V, 3, HW))
    coefs = jnp.zeros((B, V, 8, HW), jnp.float32)
    coefs = coefs.at[:, :, 0:3, :].set(A).at[:, :, 4:7, :].set(tb)

    # Features in bf16 for DMA/MXU; coordinates & accumulation stay f32.
    # Lookup features stay lane-dense [C, HW] (no transpose).
    ref_flat = ref_feat.reshape(B, C, HW).astype(feature_dtype)       # [B, C, HW]
    look_flat = lookup_feats.reshape(B, V, C, HW).astype(feature_dtype)

    kernel = functools.partial(_cost_volume_kernel,
                               height=H, width=W, num_depth=D,
                               scale_over_views=scale / float(V))

    cost = pl.pallas_call(
        kernel,
        out_shape=jax.ShapeDtypeStruct((B, D, HW), jnp.float32),
        grid=(B, n_tiles, V),                      # depth handled in-kernel
        in_specs=[
            pl.BlockSpec(memory_space=pltpu.MemorySpace.SMEM),                # depth_bins
            pl.BlockSpec((1, C, tile_p), lambda b, pt, v: (b, 0, pt)),        # ref feats
            pl.BlockSpec((1, 1, C, HW), lambda b, pt, v: (b, v, 0, 0)),       # lookup feats
            pl.BlockSpec((1, 1, 8, tile_p), lambda b, pt, v: (b, v, 0, pt)),  # proj coeffs
        ],
        out_specs=pl.BlockSpec((1, D, tile_p), lambda b, pt, v: (b, 0, pt)),
        scratch_shapes=[pltpu.VMEM((HW, tile_p), jnp.float32)],               # Corr
        compiler_params=pltpu.CompilerParams(
            dimension_semantics=("parallel", "parallel", "arbitrary"),
            vmem_limit_bytes=vmem_limit),
    )(depth_bins.astype(jnp.float32), ref_flat, look_flat, coefs)

    cost = cost.reshape(B, D, H, W)
    mask = (cost == 0.0).astype(jnp.float32)   # exactly the module's mask; fused by XLA
    return cost, mask


def _reference_forward(depth_bins, ref_feat, lookup_feats,
                       relative_poses, Ks_src, invK_ref,
                       feature_dtype=jnp.bfloat16):
    """Pure-JAX reference (same math, no Pallas) for a silent sanity check."""
    B, C, H, W = ref_feat.shape
    V = lookup_feats.shape[1]
    D = depth_bins.shape[1]
    HW = H * W
    scale = float(C) ** (-1.0)

    A, t = _build_projection_coeffs(relative_poses, Ks_src, invK_ref, H, W)
    depth = depth_bins.astype(jnp.float32)[:, None, :, None, None]      # [B,1,D,1,1]
    P = depth * A[:, :, None, :, :] + t[:, :, None, :, None]            # [B,V,D,3,HW]
    z = P[:, :, :, 2, :] + 1e-8
    rz = 1.0 / z
    px = P[:, :, :, 0, :] * rz
    py = P[:, :, :, 1, :] * rz
    gx = (px - W / 2.0) / (W / 2.0)
    gy = (py - H / 2.0) / (H / 2.0)
    gx = jnp.where((gx > 1.0) | (gx < -1.0), 2.0, gx)
    gy = jnp.where((gy > 1.0) | (gy < -1.0), 2.0, gy)
    ix = (gx + 1.0) * 0.5 * (W - 1)
    iy = (gy + 1.0) * 0.5 * (H - 1)
    x0 = jnp.floor(ix); x1 = x0 + 1.0
    y0 = jnp.floor(iy); y1 = y0 + 1.0
    wx1 = ix - x0; wx0 = 1.0 - wx1
    wy1 = iy - y0; wy0 = 1.0 - wy1

    look = lookup_feats.reshape(B, V, C, HW).astype(feature_dtype).astype(jnp.float32)
    ref = ref_feat.reshape(B, C, HW).astype(feature_dtype).astype(jnp.float32)

    def corner(xc, yc, w):
        valid = (xc >= 0.0) & (xc <= W - 1.0) & (yc >= 0.0) & (yc <= H - 1.0)
        wv = jnp.where(valid, w, 0.0)                                    # [B,V,D,HW]
        idx = jnp.clip((yc * W + xc).astype(jnp.int32), 0, HW - 1)
        idx_b = jnp.broadcast_to(idx[:, :, :, None, :], (B, V, D, C, HW))
        look_b = jnp.broadcast_to(look[:, :, None, :, :], (B, V, D, C, HW))
        g = jnp.take_along_axis(look_b, idx_b, axis=-1)                  # [B,V,D,C,HW]
        return g * wv[:, :, :, None, :]

    warped = (corner(x0, y0, wx0 * wy0) + corner(x1, y0, wx1 * wy0) +
              corner(x0, y1, wx0 * wy1) + corner(x1, y1, wx1 * wy1))     # [B,V,D,C,HW]
    diffs = scale * jnp.sum(warped * ref[:, None, None, :, :], axis=3)   # [B,V,D,HW]
    cost = jnp.mean(diffs, axis=1).reshape(B, D, H, W)
    mask = (cost == 0.0).astype(jnp.float32)
    return cost, mask


if __name__ == "__main__":
    B, V, C, H, W, D = 2, 2, 16, 16, 16, 8

    key = jax.random.PRNGKey(0)
    k1, k2 = jax.random.split(key)
    ref_feat = jax.random.normal(k1, (B, C, H, W), dtype=jnp.float32)
    lookup_feats = jax.random.normal(k2, (B, V, C, H, W), dtype=jnp.float32)
    depth_bins = jnp.broadcast_to(
        jnp.linspace(1.0, 8.0, D, dtype=jnp.float32)[None, :], (B, D))

    K = jnp.array([[float(W), 0.0, W / 2.0, 0.0],
                   [0.0, float(H), H / 2.0, 0.0],
                   [0.0, 0.0, 1.0, 0.0],
                   [0.0, 0.0, 0.0, 1.0]], dtype=jnp.float32)
    Ks_src = jnp.broadcast_to(K, (B, V, 4, 4))
    invK_ref = jnp.broadcast_to(jnp.linalg.inv(K), (B, 4, 4))

    def make_pose(theta, tx, ty, tz):
        c, s = math.cos(theta), math.sin(theta)
        return jnp.array([[c, -s, 0.0, tx],
                          [s,  c, 0.0, ty],
                          [0.0, 0.0, 1.0, tz],
                          [0.0, 0.0, 0.0, 1.0]], dtype=jnp.float32)

    poses = jnp.stack([make_pose(0.02, 0.10, 0.05, 0.00),
                       make_pose(-0.03, -0.08, 0.02, 0.05)], axis=0)
    relative_poses = jnp.broadcast_to(poses, (B, V, 4, 4))

    # tile_p=128 exercises the pixel-tiling path (HW=256 -> 2 tiles).
    cost, mask = match_features_fst_forward(
        depth_bins, ref_feat, lookup_feats, relative_poses, Ks_src, invK_ref,
        tile_p=128)
    jax.block_until_ready((cost, mask))

    ref_cost, ref_mask = _reference_forward(
        depth_bins, ref_feat, lookup_feats, relative_poses, Ks_src, invK_ref)
    assert cost.shape == (B, D, H, W) and mask.shape == (B, D, H, W)
    assert bool(jnp.allclose(cost, ref_cost, atol=2e-2, rtol=2e-2)), "cost mismatch"

    print("KERNEL_OK")
</pallas_src>

<mosaic_0001>
module attributes {stable_mosaic.version = 11 : i64} {
  func.func @_cost_volume_kernel(%arg0: i32, %arg1: i32, %arg2: i32, %arg3: memref<2x8xf32, #tpu.memory_space<smem>>, %arg4: memref<1x16x128xbf16, #tpu.memory_space<vmem>>, %arg5: memref<1x1x16x256xbf16, #tpu.memory_space<vmem>>, %arg6: memref<1x1x8x128xf32, #tpu.memory_space<vmem>>, %arg7: memref<1x8x128xf32, #tpu.memory_space<vmem>>, %arg8: memref<256x128xf32, #tpu.memory_space<vmem>>) attributes {dimension_semantics = [#tpu.dimension_semantics<parallel>, #tpu.dimension_semantics<parallel>, #tpu.dimension_semantics<arbitrary>], iteration_bounds = array<i64: 2, 2, 2>, scalar_prefetch = 0 : i64, scratch_operands = 1 : i64, tpu.core_type = #tpu.core_type<tc>, window_params = [{transform_indices = @transform_0, window_bounds = array<i64: 2, 8>}, {transform_indices = @transform_1, window_bounds = array<i64: 1, 16, 128>}, {transform_indices = @transform_2, window_bounds = array<i64: 1, 1, 16, 256>}, {transform_indices = @transform_3, window_bounds = array<i64: 1, 1, 8, 128>}, {transform_indices = @transform_4, window_bounds = array<i64: 1, 8, 128>}]} {
    %c0_i32 = arith.constant 0 : i32
    %0 = arith.cmpi eq, %arg2, %c0_i32 : i32
    %1 = arith.extui %0 : i1 to i32
    %c0_i32_0 = arith.constant 0 : i32
    %2 = arith.cmpi ne, %1, %c0_i32_0 : i32
    scf.if %2 {
      %cst_17 = arith.constant 0.000000e+00 : f32
      %18 = vector.broadcast %cst_17 : f32 to vector<1x8x128xf32>
      %c0_18 = arith.constant 0 : index
      %c0_19 = arith.constant 0 : index
      %c0_20 = arith.constant 0 : index
      %19 = vector.load %arg7[%c0_18, %c0_19, %c0_20] : memref<1x8x128xf32, #tpu.memory_space<vmem>>, vector<1x8x128xf32>
      tpu.vector_store %arg7[%c0_18, %c0_19, %c0_20], %18 {strides = array<i32>} : memref<1x8x128xf32, #tpu.memory_space<vmem>>, vector<1x8x128xf32>,
    } else {
    }
    %c0 = arith.constant 0 : index
    %c0_1 = arith.constant 0 : index
    %c0_2 = arith.constant 0 : index
    %c0_3 = arith.constant 0 : index
    %3 = vector.load %arg5[%c0, %c0_1, %c0_2, %c0_3] : memref<1x1x16x256xbf16, #tpu.memory_space<vmem>>, vector<1x1x16x256xbf16>
    %4 = vector.shape_cast %3 : vector<1x1x16x256xbf16> to vector<16x256xbf16>
    %c0_4 = arith.constant 0 : index
    %c0_5 = arith.constant 0 : index
    %c0_6 = arith.constant 0 : index
    %5 = vector.load %arg4[%c0_4, %c0_5, %c0_6] : memref<1x16x128xbf16, #tpu.memory_space<vmem>>, vector<1x16x128xbf16>
    %6 = vector.shape_cast %5 : vector<1x16x128xbf16> to vector<16x128xbf16>
    %cst = arith.constant dense<0.000000e+00> : vector<256x128xf32>
    %7 = tpu.matmul %4, %6, %cst {dimension_numbers = #tpu.dot_dimension_numbers<[0], [0], [1], [1], [0, 1, 1, 1], [], []>} : vector<16x256xbf16>, vector<16x128xbf16>, vector<256x128xf32> -> vector<256x128xf32>
    %c0_7 = arith.constant 0 : index
    %c0_8 = arith.constant 0 : index
    %8 = vector.load %arg8[%c0_7, %c0_8] : memref<256x128xf32, #tpu.memory_space<vmem>>, vector<256x128xf32>
    tpu.vector_store %arg8[%c0_7, %c0_8], %7 {strides = array<i32>} : memref<256x128xf32, #tpu.memory_space<vmem>>, vector<256x128xf32>,
    %c0_9 = arith.constant 0 : index
    %c0_10 = arith.constant 0 : index
    %c0_11 = arith.constant 0 : index
    %c0_12 = arith.constant 0 : index
    %9 = vector.load %arg6[%c0_9, %c0_10, %c0_11, %c0_12] : memref<1x1x8x128xf32, #tpu.memory_space<vmem>>, vector<1x1x8x128xf32>
    %10 = vector.shape_cast %9 : vector<1x1x8x128xf32> to vector<8x128xf32>
    %11 = vector.extract_strided_slice %10 {offsets = [0, 0], sizes = [4, 128], strides = [1, 1]} : vector<8x128xf32> to vector<4x128xf32>
    %12 = vector.extract_strided_slice %10 {offsets = [4, 0], sizes = [4, 128], strides = [1, 1]} : vector<8x128xf32> to vector<4x128xf32>
    %13 = tpu.iota {dimensions = array<i32: 0>} : vector<16x128xi32>
    %c0_i32_13 = arith.constant 0 : i32
    %c8_i32 = arith.constant 8 : i32
    %14 = arith.addi %c0_i32_13, %c8_i32 : i32
    %c1_i32 = arith.constant 1 : i32
    scf.for %arg9 = %c0_i32_13 to %14 step %c1_i32  : i32 {
      %c1_i32_17 = arith.constant 1 : i32
      %18 = arith.muli %arg9, %c1_i32_17 : i32
      %c0_i32_18 = arith.constant 0 : i32
      %19 = arith.addi %c0_i32_18, %18 : i32
      %20 = arith.index_cast %arg0 : i32 to index
      %21 = arith.index_cast %19 : i32 to index
      %22 = memref.load %arg3[%20, %21] : memref<2x8xf32, #tpu.memory_space<smem>>
      %23 = vector.broadcast %22 : f32 to vector<4x128xf32>
      %24 = arith.mulf %23, %11 : vector<4x128xf32>
      %25 = arith.addf %24, %12 : vector<4x128xf32>
      %26 = vector.extract_strided_slice %25 {offsets = [2, 0], sizes = [1, 128], strides = [1, 1]} : vector<4x128xf32> to vector<1x128xf32>
      %cst_19 = arith.constant 9.99999993E-9 : f32
      %27 = vector.broadcast %cst_19 : f32 to vector<1x128xf32>
      %28 = arith.addf %26, %27 : vector<1x128xf32>
      %cst_20 = arith.constant 1.000000e+00 : f32
      %29 = vector.broadcast %cst_20 : f32 to vector<1x128xf32>
      %30 = arith.divf %29, %28 : vector<1x128xf32>
      %31 = vector.extract_strided_slice %25 {offsets = [0, 0], sizes = [1, 128], strides = [1, 1]} : vector<4x128xf32> to vector<1x128xf32>
      %32 = arith.mulf %31, %30 : vector<1x128xf32>
      %33 = vector.extract_strided_slice %25 {offsets = [1, 0], sizes = [1, 128], strides = [1, 1]} : vector<4x128xf32> to vector<1x128xf32>
      %34 = arith.mulf %33, %30 : vector<1x128xf32>
      %cst_21 = arith.constant 8.000000e+00 : f32
      %35 = vector.broadcast %cst_21 : f32 to vector<1x128xf32>
      %36 = arith.subf %32, %35 : vector<1x128xf32>
      %cst_22 = arith.constant 8.000000e+00 : f32
      %37 = vector.broadcast %cst_22 : f32 to vector<1x128xf32>
      %38 = arith.divf %36, %37 : vector<1x128xf32>
      %cst_23 = arith.constant 8.000000e+00 : f32
      %39 = vector.broadcast %cst_23 : f32 to vector<1x128xf32>
      %40 = arith.subf %34, %39 : vector<1x128xf32>
      %cst_24 = arith.constant 8.000000e+00 : f32
      %41 = vector.broadcast %cst_24 : f32 to vector<1x128xf32>
      %42 = arith.divf %40, %41 : vector<1x128xf32>
      %cst_25 = arith.constant 1.000000e+00 : f32
      %43 = vector.broadcast %cst_25 : f32 to vector<1x128xf32>
      %44 = arith.cmpf ogt, %38, %43 : vector<1x128xf32>
      %cst_26 = arith.constant -1.000000e+00 : f32
      %45 = vector.broadcast %cst_26 : f32 to vector<1x128xf32>
      %46 = arith.cmpf olt, %38, %45 : vector<1x128xf32>
      %47 = arith.ori %44, %46 : vector<1x128xi1>
      %cst_27 = arith.constant 2.000000e+00 : f32
      %48 = vector.broadcast %cst_27 : f32 to vector<1x128xf32>
      %49 = arith.select %47, %48, %38 : vector<1x128xi1>, vector<1x128xf32>
      %cst_28 = arith.constant 1.000000e+00 : f32
      %50 = vector.broadcast %cst_28 : f32 to vector<1x128xf32>
      %51 = arith.cmpf ogt, %42, %50 : vector<1x128xf32>
      %cst_29 = arith.constant -1.000000e+00 : f32
      %52 = vector.broadcast %cst_29 : f32 to vector<1x128xf32>
      %53 = arith.cmpf olt, %42, %52 : vector<1x128xf32>
      %54 = arith.ori %51, %53 : vector<1x128xi1>
      %cst_30 = arith.constant 2.000000e+00 : f32
      %55 = vector.broadcast %cst_30 : f32 to vector<1x128xf32>
      %56 = arith.select %54, %55, %42 : vector<1x128xi1>, vector<1x128xf32>
      %cst_31 = arith.constant 1.000000e+00 : f32
      %57 = vector.broadcast %cst_31 : f32 to vector<1x128xf32>
      %58 = arith.addf %49, %57 : vector<1x128xf32>
      %cst_32 = arith.constant 5.000000e-01 : f32
      %59 = vector.broadcast %cst_32 : f32 to vector<1x128xf32>
      %60 = arith.mulf %58, %59 : vector<1x128xf32>
      %cst_33 = arith.constant 1.500000e+01 : f32
      %61 = vector.broadcast %cst_33 : f32 to vector<1x128xf32>
      %62 = arith.mulf %60, %61 : vector<1x128xf32>
      %cst_34 = arith.constant 1.000000e+00 : f32
      %63 = vector.broadcast %cst_34 : f32 to vector<1x128xf32>
      %64 = arith.addf %56, %63 : vector<1x128xf32>
      %cst_35 = arith.constant 5.000000e-01 : f32
      %65 = vector.broadcast %cst_35 : f32 to vector<1x128xf32>
      %66 = arith.mulf %64, %65 : vector<1x128xf32>
      %cst_36 = arith.constant 1.500000e+01 : f32
      %67 = vector.broadcast %cst_36 : f32 to vector<1x128xf32>
      %68 = arith.mulf %66, %67 : vector<1x128xf32>
      %69 = math.floor %62 : vector<1x128xf32>
      %70 = math.floor %68 : vector<1x128xf32>
      %71 = arith.subf %62, %69 : vector<1x128xf32>
      %cst_37 = arith.constant 1.000000e+00 : f32
      %72 = vector.broadcast %cst_37 : f32 to vector<1x128xf32>
      %73 = arith.subf %72, %71 : vector<1x128xf32>
      %74 = arith.subf %68, %70 : vector<1x128xf32>
      %cst_38 = arith.constant 1.000000e+00 : f32
      %75 = vector.broadcast %cst_38 : f32 to vector<1x128xf32>
      %76 = arith.subf %75, %74 : vector<1x128xf32>
      %77 = arith.fptosi %69 : vector<1x128xf32> to vector<1x128xi32>
      %78 = arith.fptosi %70 : vector<1x128xf32> to vector<1x128xi32>
      %c1_i32_39 = arith.constant 1 : i32
      %79 = vector.broadcast %c1_i32_39 : i32 to vector<1x128xi32>
      %80 = arith.addi %77, %79 : vector<1x128xi32>
      %c1_i32_40 = arith.constant 1 : i32
      %81 = vector.broadcast %c1_i32_40 : i32 to vector<1x128xi32>
      %82 = arith.addi %78, %81 : vector<1x128xi32>
      %cst_41 = arith.constant 0.000000e+00 : f32
      %83 = vector.broadcast %cst_41 : f32 to vector<16x128xf32>
      %c0_i32_42 = arith.constant 0 : i32
      %84 = vector.broadcast %c0_i32_42 : i32 to vector<1x128xi32>
      %85 = arith.cmpi eq, %84, %78 : vector<1x128xi32>
      %cst_43 = arith.constant 0.000000e+00 : f32
      %86 = vector.broadcast %cst_43 : f32 to vector<1x128xf32>
      %87 = arith.select %85, %76, %86 : vector<1x128xi1>, vector<1x128xf32>
      %88 = vector.broadcast %c0_i32_42 : i32 to vector<1x128xi32>
      %89 = arith.cmpi eq, %88, %82 : vector<1x128xi32>
      %cst_44 = arith.constant 0.000000e+00 : f32
      %90 = vector.broadcast %cst_44 : f32 to vector<1x128xf32>
      %91 = arith.select %89, %74, %90 : vector<1x128xi1>, vector<1x128xf32>
      %92 = arith.addf %87, %91 : vector<1x128xf32>
      %c16_i32 = arith.constant 16 : i32
      %93 = arith.muli %c0_i32_42, %c16_i32 : i32
      %94 = tpu.assume_multiple %93, 16 : i32
      %95 = arith.index_cast %94 : i32 to index
      %c0_45 = arith.constant 0 : index
      %96 = vector.load %arg8[%95, %c0_45] : memref<256x128xf32, #tpu.memory_space<vmem>>, vector<16x128xf32>
      %97 = vector.broadcast %92 : vector<1x128xf32> to vector<16x128xf32>
      %98 = arith.mulf %97, %96 : vector<16x128xf32>
      %99 = arith.addf %83, %98 : vector<16x128xf32>
      %c1_i32_46 = arith.constant 1 : i32
      %100 = vector.broadcast %c1_i32_46 : i32 to vector<1x128xi32>
      %101 = arith.cmpi eq, %100, %78 : vector<1x128xi32>
      %cst_47 = arith.constant 0.000000e+00 : f32
      %102 = vector.broadcast %cst_47 : f32 to vector<1x128xf32>
      %103 = arith.select %101, %76, %102 : vector<1x128xi1>, vector<1x128xf32>
      %104 = vector.broadcast %c1_i32_46 : i32 to vector<1x128xi32>
      %105 = arith.cmpi eq, %104, %82 : vector<1x128xi32>
      %cst_48 = arith.constant 0.000000e+00 : f32
      %106 = vector.broadcast %cst_48 : f32 to vector<1x128xf32>
      %107 = arith.select %105, %74, %106 : vector<1x128xi1>, vector<1x128xf32>
      %108 = arith.addf %103, %107 : vector<1x128xf32>
      %c16_i32_49 = arith.constant 16 : i32
      %109 = arith.muli %c1_i32_46, %c16_i32_49 : i32
      %110 = tpu.assume_multiple %109, 16 : i32
      %111 = arith.index_cast %110 : i32 to index
      %c0_50 = arith.constant 0 : index
      %112 = vector.load %arg8[%111, %c0_50] : memref<256x128xf32, #tpu.memory_space<vmem>>, vector<16x128xf32>
      %113 = vector.broadcast %108 : vector<1x128xf32> to vector<16x128xf32>
      %114 = arith.mulf %113, %112 : vector<16x128xf32>
      %115 = arith.addf %99, %114 : vector<16x128xf32>
      %c2_i32 = arith.constant 2 : i32
      %116 = vector.broadcast %c2_i32 : i32 to vector<1x128xi32>
      %117 = arith.cmpi eq, %116, %78 : vector<1x128xi32>
      %cst_51 = arith.constant 0.000000e+00 : f32
      %118 = vector.broadcast %cst_51 : f32 to vector<1x128xf32>
      %119 = arith.select %117, %76, %118 : vector<1x128xi1>, vector<1x128xf32>
      %120 = vector.broadcast %c2_i32 : i32 to vector<1x128xi32>
      %121 = arith.cmpi eq, %120, %82 : vector<1x128xi32>
      %cst_52 = arith.constant 0.000000e+00 : f32
      %122 = vector.broadcast %cst_52 : f32 to vector<1x128xf32>
      %123 = arith.select %121, %74, %122 : vector<1x128xi1>, vector<1x128xf32>
      %124 = arith.addf %119, %123 : vector<1x128xf32>
      %c16_i32_53 = arith.constant 16 : i32
      %125 = arith.muli %c2_i32, %c16_i32_53 : i32
      %126 = tpu.assume_multiple %125, 16 : i32
      %127 = arith.index_cast %126 : i32 to index
      %c0_54 = arith.constant 0 : index
      %128 = vector.load %arg8[%127, %c0_54] : memref<256x128xf32, #tpu.memory_space<vmem>>, vector<16x128xf32>
      %129 = vector.broadcast %124 : vector<1x128xf32> to vector<16x128xf32>
      %130 = arith.mulf %129, %128 : vector<16x128xf32>
      %131 = arith.addf %115, %130 : vector<16x128xf32>
      %c3_i32 = arith.constant 3 : i32
      %132 = vector.broadcast %c3_i32 : i32 to vector<1x128xi32>
      %133 = arith.cmpi eq, %132, %78 : vector<1x128xi32>
      %cst_55 = arith.constant 0.000000e+00 : f32
      %134 = vector.broadcast %cst_55 : f32 to vector<1x128xf32>
      %135 = arith.select %133, %76, %134 : vector<1x128xi1>, vector<1x128xf32>
      %136 = vector.broadcast %c3_i32 : i32 to vector<1x128xi32>
      %137 = arith.cmpi eq, %136, %82 : vector<1x128xi32>
      %cst_56 = arith.constant 0.000000e+00 : f32
      %138 = vector.broadcast %cst_56 : f32 to vector<1x128xf32>
      %139 = arith.select %137, %74, %138 : vector<1x128xi1>, vector<1x128xf32>
      %140 = arith.addf %135, %139 : vector<1x128xf32>
      %c16_i32_57 = arith.constant 16 : i32
      %141 = arith.muli %c3_i32, %c16_i32_57 : i32
      %142 = tpu.assume_multiple %141, 16 : i32
      %143 = arith.index_cast %142 : i32 to index
      %c0_58 = arith.constant 0 : index
      %144 = vector.load %arg8[%143, %c0_58] : memref<256x128xf32, #tpu.memory_space<vmem>>, vector<16x128xf32>
      %145 = vector.broadcast %140 : vector<1x128xf32> to vector<16x128xf32>
      %146 = arith.mulf %145, %144 : vector<16x128xf32>
      %147 = arith.addf %131, %146 : vector<16x128xf32>
      %c4_i32 = arith.constant 4 : i32
      %148 = vector.broadcast %c4_i32 : i32 to vector<1x128xi32>
      %149 = arith.cmpi eq, %148, %78 : vector<1x128xi32>
      %cst_59 = arith.constant 0.000000e+00 : f32
      %150 = vector.broadcast %cst_59 : f32 to vector<1x128xf32>
      %151 = arith.select %149, %76, %150 : vector<1x128xi1>, vector<1x128xf32>
      %152 = vector.broadcast %c4_i32 : i32 to vector<1x128xi32>
      %153 = arith.cmpi eq, %152, %82 : vector<1x128xi32>
      %cst_60 = arith.constant 0.000000e+00 : f32
      %154 = vector.broadcast %cst_60 : f32 to vector<1x128xf32>
      %155 = arith.select %153, %74, %154 : vector<1x128xi1>, vector<1x128xf32>
      %156 = arith.addf %151, %155 : vector<1x128xf32>
      %c16_i32_61 = arith.constant 16 : i32
      %157 = arith.muli %c4_i32, %c16_i32_61 : i32
      %158 = tpu.assume_multiple %157, 16 : i32
      %159 = arith.index_cast %158 : i32 to index
      %c0_62 = arith.constant 0 : index
      %160 = vector.load %arg8[%159, %c0_62] : memref<256x128xf32, #tpu.memory_space<vmem>>, vector<16x128xf32>
      %161 = vector.broadcast %156 : vector<1x128xf32> to vector<16x128xf32>
      %162 = arith.mulf %161, %160 : vector<16x128xf32>
      %163 = arith.addf %147, %162 : vector<16x128xf32>
      %c5_i32 = arith.constant 5 : i32
      %164 = vector.broadcast %c5_i32 : i32 to vector<1x128xi32>
      %165 = arith.cmpi eq, %164, %78 : vector<1x128xi32>
      %cst_63 = arith.constant 0.000000e+00 : f32
      %166 = vector.broadcast %cst_63 : f32 to vector<1x128xf32>
      %167 = arith.select %165, %76, %166 : vector<1x128xi1>, vector<1x128xf32>
      %168 = vector.broadcast %c5_i32 : i32 to vector<1x128xi32>
      %169 = arith.cmpi eq, %168, %82 : vector<1x128xi32>
      %cst_64 = arith.constant 0.000000e+00 : f32
      %170 = vector.broadcast %cst_64 : f32 to vector<1x128xf32>
      %171 = arith.select %169, %74, %170 : vector<1x128xi1>, vector<1x128xf32>
      %172 = arith.addf %167, %171 : vector<1x128xf32>
      %c16_i32_65 = arith.constant 16 : i32
      %173 = arith.muli %c5_i32, %c16_i32_65 : i32
      %174 = tpu.assume_multiple %173, 16 : i32
      %175 = arith.index_cast %174 : i32 to index
      %c0_66 = arith.constant 0 : index
      %176 = vector.load %arg8[%175, %c0_66] : memref<256x128xf32, #tpu.memory_space<vmem>>, vector<16x128xf32>
      %177 = vector.broadcast %172 : vector<1x128xf32> to vector<16x128xf32>
      %178 = arith.mulf %177, %176 : vector<16x128xf32>
      %179 = arith.addf %163, %178 : vector<16x128xf32>
      %c6_i32 = arith.constant 6 : i32
      %180 = vector.broadcast %c6_i32 : i32 to vector<1x128xi32>
      %181 = arith.cmpi eq, %180, %78 : vector<1x128xi32>
      %cst_67 = arith.constant 0.000000e+00 : f32
      %182 = vector.broadcast %cst_67 : f32 to vector<1x128xf32>
      %183 = arith.select %181, %76, %182 : vector<1x128xi1>, vector<1x128xf32>
      %184 = vector.broadcast %c6_i32 : i32 to vector<1x128xi32>
      %185 = arith.cmpi eq, %184, %82 : vector<1x128xi32>
      %cst_68 = arith.constant 0.000000e+00 : f32
      %186 = vector.broadcast %cst_68 : f32 to vector<1x128xf32>
      %187 = arith.select %185, %74, %186 : vector<1x128xi1>, vector<1x128xf32>
      %188 = arith.addf %183, %187 : vector<1x128xf32>
      %c16_i32_69 = arith.constant 16 : i32
      %189 = arith.muli %c6_i32, %c16_i32_69 : i32
      %190 = tpu.assume_multiple %189, 16 : i32
      %191 = arith.index_cast %190 : i32 to index
      %c0_70 = arith.constant 0 : index
      %192 = vector.load %arg8[%191, %c0_70] : memref<256x128xf32, #tpu.memory_space<vmem>>, vector<16x128xf32>
      %193 = vector.broadcast %188 : vector<1x128xf32> to vector<16x128xf32>
      %194 = arith.mulf %193, %192 : vector<16x128xf32>
      %195 = arith.addf %179, %194 : vector<16x128xf32>
      %c7_i32 = arith.constant 7 : i32
      %196 = vector.broadcast %c7_i32 : i32 to vector<1x128xi32>
      %197 = arith.cmpi eq, %196, %78 : vector<1x128xi32>
      %cst_71 = arith.constant 0.000000e+00 : f32
      %198 = vector.broadcast %cst_71 : f32 to vector<1x128xf32>
      %199 = arith.select %197, %76, %198 : vector<1x128xi1>, vector<1x128xf32>
      %200 = vector.broadcast %c7_i32 : i32 to vector<1x128xi32>
      %201 = arith.cmpi eq, %200, %82 : vector<1x128xi32>
      %cst_72 = arith.constant 0.000000e+00 : f32
      %202 = vector.broadcast %cst_72 : f32 to vector<1x128xf32>
      %203 = arith.select %201, %74, %202 : vector<1x128xi1>, vector<1x128xf32>
      %204 = arith.addf %199, %203 : vector<1x128xf32>
      %c16_i32_73 = arith.constant 16 : i32
      %205 = arith.muli %c7_i32, %c16_i32_73 : i32
      %206 = tpu.assume_multiple %205, 16 : i32
      %207 = arith.index_cast %206 : i32 to index
      %c0_74 = arith.constant 0 : index
      %208 = vector.load %arg8[%207, %c0_74] : memref<256x128xf32, #tpu.memory_space<vmem>>, vector<16x128xf32>
      %209 = vector.broadcast %204 : vector<1x128xf32> to vector<16x128xf32>
      %210 = arith.mulf %209, %208 : vector<16x128xf32>
      %211 = arith.addf %195, %210 : vector<16x128xf32>
      %c8_i32_75 = arith.constant 8 : i32
      %212 = vector.broadcast %c8_i32_75 : i32 to vector<1x128xi32>
      %213 = arith.cmpi eq, %212, %78 : vector<1x128xi32>
      %cst_76 = arith.constant 0.000000e+00 : f32
      %214 = vector.broadcast %cst_76 : f32 to vector<1x128xf32>
      %215 = arith.select %213, %76, %214 : vector<1x128xi1>, vector<1x128xf32>
      %216 = vector.broadcast %c8_i32_75 : i32 to vector<1x128xi32>
      %217 = arith.cmpi eq, %216, %82 : vector<1x128xi32>
      %cst_77 = arith.constant 0.000000e+00 : f32
      %218 = vector.broadcast %cst_77 : f32 to vector<1x128xf32>
      %219 = arith.select %217, %74, %218 : vector<1x128xi1>, vector<1x128xf32>
      %220 = arith.addf %215, %219 : vector<1x128xf32>
      %c16_i32_78 = arith.constant 16 : i32
      %221 = arith.muli %c8_i32_75, %c16_i32_78 : i32
      %222 = tpu.assume_multiple %221, 16 : i32
      %223 = arith.index_cast %222 : i32 to index
      %c0_79 = arith.constant 0 : index
      %224 = vector.load %arg8[%223, %c0_79] : memref<256x128xf32, #tpu.memory_space<vmem>>, vector<16x128xf32>
      %225 = vector.broadcast %220 : vector<1x128xf32> to vector<16x128xf32>
      %226 = arith.mulf %225, %224 : vector<16x128xf32>
      %227 = arith.addf %211, %226 : vector<16x128xf32>
      %c9_i32 = arith.constant 9 : i32
      %228 = vector.broadcast %c9_i32 : i32 to vector<1x128xi32>
      %229 = arith.cmpi eq, %228, %78 : vector<1x128xi32>
      %cst_80 = arith.constant 0.000000e+00 : f32
      %230 = vector.broadcast %cst_80 : f32 to vector<1x128xf32>
      %231 = arith.select %229, %76, %230 : vector<1x128xi1>, vector<1x128xf32>
      %232 = vector.broadcast %c9_i32 : i32 to vector<1x128xi32>
      %233 = arith.cmpi eq, %232, %82 : vector<1x128xi32>
      %cst_81 = arith.constant 0.000000e+00 : f32
      %234 = vector.broadcast %cst_81 : f32 to vector<1x128xf32>
      %235 = arith.select %233, %74, %234 : vector<1x128xi1>, vector<1x128xf32>
      %236 = arith.addf %231, %235 : vector<1x128xf32>
      %c16_i32_82 = arith.constant 16 : i32
      %237 = arith.muli %c9_i32, %c16_i32_82 : i32
      %238 = tpu.assume_multiple %237, 16 : i32
      %239 = arith.index_cast %238 : i32 to index
      %c0_83 = arith.constant 0 : index
      %240 = vector.load %arg8[%239, %c0_83] : memref<256x128xf32, #tpu.memory_space<vmem>>, vector<16x128xf32>
      %241 = vector.broadcast %236 : vector<1x128xf32> to vector<16x128xf32>
      %242 = arith.mulf %241, %240 : vector<16x128xf32>
      %243 = arith.addf %227, %242 : vector<16x128xf32>
      %c10_i32 = arith.constant 10 : i32
      %244 = vector.broadcast %c10_i32 : i32 to vector<1x128xi32>
      %245 = arith.cmpi eq, %244, %78 : vector<1x128xi32>
      %cst_84 = arith.constant 0.000000e+00 : f32
      %246 = vector.broadcast %cst_84 : f32 to vector<1x128xf32>
      %247 = arith.select %245, %76, %246 : vector<1x128xi1>, vector<1x128xf32>
      %248 = vector.broadcast %c10_i32 : i32 to vector<1x128xi32>
      %249 = arith.cmpi eq, %248, %82 : vector<1x128xi32>
      %cst_85 = arith.constant 0.000000e+00 : f32
      %250 = vector.broadcast %cst_85 : f32 to vector<1x128xf32>
      %251 = arith.select %249, %74, %250 : vector<1x128xi1>, vector<1x128xf32>
      %252 = arith.addf %247, %251 : vector<1x128xf32>
      %c16_i32_86 = arith.constant 16 : i32
      %253 = arith.muli %c10_i32, %c16_i32_86 : i32
      %254 = tpu.assume_multiple %253, 16 : i32
      %255 = arith.index_cast %254 : i32 to index
      %c0_87 = arith.constant 0 : index
      %256 = vector.load %arg8[%255, %c0_87] : memref<256x128xf32, #tpu.memory_space<vmem>>, vector<16x128xf32>
      %257 = vector.broadcast %252 : vector<1x128xf32> to vector<16x128xf32>
      %258 = arith.mulf %257, %256 : vector<16x128xf32>
      %259 = arith.addf %243, %258 : vector<16x128xf32>
      %c11_i32 = arith.constant 11 : i32
      %260 = vector.broadcast %c11_i32 : i32 to vector<1x128xi32>
      %261 = arith.cmpi eq, %260, %78 : vector<1x128xi32>
      %cst_88 = arith.constant 0.000000e+00 : f32
      %262 = vector.broadcast %cst_88 : f32 to vector<1x128xf32>
      %263 = arith.select %261, %76, %262 : vector<1x128xi1>, vector<1x128xf32>
      %264 = vector.broadcast %c11_i32 : i32 to vector<1x128xi32>
      %265 = arith.cmpi eq, %264, %82 : vector<1x128xi32>
      %cst_89 = arith.constant 0.000000e+00 : f32
      %266 = vector.broadcast %cst_89 : f32 to vector<1x128xf32>
      %267 = arith.select %265, %74, %266 : vector<1x128xi1>, vector<1x128xf32>
      %268 = arith.addf %263, %267 : vector<1x128xf32>
      %c16_i32_90 = arith.constant 16 : i32
      %269 = arith.muli %c11_i32, %c16_i32_90 : i32
      %270 = tpu.assume_multiple %269, 16 : i32
      %271 = arith.index_cast %270 : i32 to index
      %c0_91 = arith.constant 0 : index
      %272 = vector.load %arg8[%271, %c0_91] : memref<256x128xf32, #tpu.memory_space<vmem>>, vector<16x128xf32>
      %273 = vector.broadcast %268 : vector<1x128xf32> to vector<16x128xf32>
      %274 = arith.mulf %273, %272 : vector<16x128xf32>
      %275 = arith.addf %259, %274 : vector<16x128xf32>
      %c12_i32 = arith.constant 12 : i32
      %276 = vector.broadcast %c12_i32 : i32 to vector<1x128xi32>
      %277 = arith.cmpi eq, %276, %78 : vector<1x128xi32>
      %cst_92 = arith.constant 0.000000e+00 : f32
      %278 = vector.broadcast %cst_92 : f32 to vector<1x128xf32>
      %279 = arith.select %277, %76, %278 : vector<1x128xi1>, vector<1x128xf32>
      %280 = vector.broadcast %c12_i32 : i32 to vector<1x128xi32>
      %281 = arith.cmpi eq, %280, %82 : vector<1x128xi32>
      %cst_93 = arith.constant 0.000000e+00 : f32
      %282 = vector.broadcast %cst_93 : f32 to vector<1x128xf32>
      %283 = arith.select %281, %74, %282 : vector<1x128xi1>, vector<1x128xf32>
      %284 = arith.addf %279, %283 : vector<1x128xf32>
      %c16_i32_94 = arith.constant 16 : i32
      %285 = arith.muli %c12_i32, %c16_i32_94 : i32
      %286 = tpu.assume_multiple %285, 16 : i32
      %287 = arith.index_cast %286 : i32 to index
      %c0_95 = arith.constant 0 : index
      %288 = vector.load %arg8[%287, %c0_95] : memref<256x128xf32, #tpu.memory_space<vmem>>, vector<16x128xf32>
      %289 = vector.broadcast %284 : vector<1x128xf32> to vector<16x128xf32>
      %290 = arith.mulf %289, %288 : vector<16x128xf32>
      %291 = arith.addf %275, %290 : vector<16x128xf32>
      %c13_i32 = arith.constant 13 : i32
      %292 = vector.broadcast %c13_i32 : i32 to vector<1x128xi32>
      %293 = arith.cmpi eq, %292, %78 : vector<1x128xi32>
      %cst_96 = arith.constant 0.000000e+00 : f32
      %294 = vector.broadcast %cst_96 : f32 to vector<1x128xf32>
      %295 = arith.select %293, %76, %294 : vector<1x128xi1>, vector<1x128xf32>
      %296 = vector.broadcast %c13_i32 : i32 to vector<1x128xi32>
      %297 = arith.cmpi eq, %296, %82 : vector<1x128xi32>
      %cst_97 = arith.constant 0.000000e+00 : f32
      %298 = vector.broadcast %cst_97 : f32 to vector<1x128xf32>
      %299 = arith.select %297, %74, %298 : vector<1x128xi1>, vector<1x128xf32>
      %300 = arith.addf %295, %299 : vector<1x128xf32>
      %c16_i32_98 = arith.constant 16 : i32
      %301 = arith.muli %c13_i32, %c16_i32_98 : i32
      %302 = tpu.assume_multiple %301, 16 : i32
      %303 = arith.index_cast %302 : i32 to index
      %c0_99 = arith.constant 0 : index
      %304 = vector.load %arg8[%303, %c0_99] : memref<256x128xf32, #tpu.memory_space<vmem>>, vector<16x128xf32>
      %305 = vector.broadcast %300 : vector<1x128xf32> to vector<16x128xf32>
      %306 = arith.mulf %305, %304 : vector<16x128xf32>
      %307 = arith.addf %291, %306 : vector<16x128xf32>
      %c14_i32 = arith.constant 14 : i32
      %308 = vector.broadcast %c14_i32 : i32 to vector<1x128xi32>
      %309 = arith.cmpi eq, %308, %78 : vector<1x128xi32>
      %cst_100 = arith.constant 0.000000e+00 : f32
      %310 = vector.broadcast %cst_100 : f32 to vector<1x128xf32>
      %311 = arith.select %309, %76, %310 : vector<1x128xi1>, vector<1x128xf32>
      %312 = vector.broadcast %c14_i32 : i32 to vector<1x128xi32>
      %313 = arith.cmpi eq, %312, %82 : vector<1x128xi32>
      %cst_101 = arith.constant 0.000000e+00 : f32
      %314 = vector.broadcast %cst_101 : f32 to vector<1x128xf32>
      %315 = arith.select %313, %74, %314 : vector<1x128xi1>, vector<1x128xf32>
      %316 = arith.addf %311, %315 : vector<1x128xf32>
      %c16_i32_102 = arith.constant 16 : i32
      %317 = arith.muli %c14_i32, %c16_i32_102 : i32
      %318 = tpu.assume_multiple %317, 16 : i32
      %319 = arith.index_cast %318 : i32 to index
      %c0_103 = arith.constant 0 : index
      %320 = vector.load %arg8[%319, %c0_103] : memref<256x128xf32, #tpu.memory_space<vmem>>, vector<16x128xf32>
      %321 = vector.broadcast %316 : vector<1x128xf32> to vector<16x128xf32>
      %322 = arith.mulf %321, %320 : vector<16x128xf32>
      %323 = arith.addf %307, %322 : vector<16x128xf32>
      %c15_i32 = arith.constant 15 : i32
      %324 = vector.broadcast %c15_i32 : i32 to vector<1x128xi32>
      %325 = arith.cmpi eq, %324, %78 : vector<1x128xi32>
      %cst_104 = arith.constant 0.000000e+00 : f32
      %326 = vector.broadcast %cst_104 : f32 to vector<1x128xf32>
      %327 = arith.select %325, %76, %326 : vector<1x128xi1>, vector<1x128xf32>
      %328 = vector.broadcast %c15_i32 : i32 to vector<1x128xi32>
      %329 = arith.cmpi eq, %328, %82 : vector<1x128xi32>
      %cst_105 = arith.constant 0.000000e+00 : f32
      %330 = vector.broadcast %cst_105 : f32 to vector<1x128xf32>
      %331 = arith.select %329, %74, %330 : vector<1x128xi1>, vector<1x128xf32>
      %332 = arith.addf %327, %331 : vector<1x128xf32>
      %c16_i32_106 = arith.constant 16 : i32
      %333 = arith.muli %c15_i32, %c16_i32_106 : i32
      %334 = tpu.assume_multiple %333, 16 : i32
      %335 = arith.index_cast %334 : i32 to index
      %c0_107 = arith.constant 0 : index
      %336 = vector.load %arg8[%335, %c0_107] : memref<256x128xf32, #tpu.memory_space<vmem>>, vector<16x128xf32>
      %337 = vector.broadcast %332 : vector<1x128xf32> to vector<16x128xf32>
      %338 = arith.mulf %337, %336 : vector<16x128xf32>
      %339 = arith.addf %323, %338 : vector<16x128xf32>
      %c16_i32_108 = arith.constant 16 : i32
      %340 = vector.broadcast %77 : vector<1x128xi32> to vector<16x128xi32>
      %341 = arith.cmpi eq, %13, %340 : vector<16x128xi32>
      %cst_109 = arith.constant 0.000000e+00 : f32
      %342 = vector.shape_cast %73 : vector<1x128xf32> to vector<1x128xf32>
      %343 = vector.broadcast %342 : vector<1x128xf32> to vector<16x128xf32>
      %344 = vector.broadcast %cst_109 : f32 to vector<16x128xf32>
      %345 = arith.select %341, %343, %344 : vector<16x128xi1>, vector<16x128xf32>
      %346 = vector.broadcast %80 : vector<1x128xi32> to vector<16x128xi32>
      %347 = arith.cmpi eq, %13, %346 : vector<16x128xi32>
      %cst_110 = arith.constant 0.000000e+00 : f32
      %348 = vector.shape_cast %71 : vector<1x128xf32> to vector<1x128xf32>
      %349 = vector.broadcast %348 : vector<1x128xf32> to vector<16x128xf32>
      %350 = vector.broadcast %cst_110 : f32 to vector<16x128xf32>
      %351 = arith.select %347, %349, %350 : vector<16x128xi1>, vector<16x128xf32>
      %352 = arith.addf %345, %351 : vector<16x128xf32>
      %353 = arith.mulf %339, %352 : vector<16x128xf32>
      %cst_111 = arith.constant dense<0.000000e+00> : vector<128xf32>
      %354 = vector.multi_reduction <add>, %353, %cst_111 [0] : vector<16x128xf32> to vector<128xf32>
      %355 = vector.shape_cast %354 : vector<128xf32> to vector<1x128xf32>
      %c0_112 = arith.constant 0 : index
      %356 = arith.index_cast %19 : i32 to index
      %c0_113 = arith.constant 0 : index
      %357 = vector.load %arg7[%c0_112, %356, %c0_113] : memref<1x8x128xf32, #tpu.memory_space<vmem>>, vector<1x1x128xf32>
      %358 = vector.shape_cast %357 : vector<1x1x128xf32> to vector<1x128xf32>
      %359 = arith.addf %358, %355 : vector<1x128xf32>
      %c0_114 = arith.constant 0 : index
      %360 = arith.index_cast %19 : i32 to index
      %c0_115 = arith.constant 0 : index
      %361 = vector.load %arg7[%c0_114, %360, %c0_115] : memref<1x8x128xf32, #tpu.memory_space<vmem>>, vector<1x1x128xf32>
      %362 = vector.shape_cast %361 : vector<1x1x128xf32> to vector<1x128xf32>
      %363 = vector.shape_cast %359 : vector<1x128xf32> to vector<1x1x128xf32>
      tpu.vector_store %arg7[%c0_114, %360, %c0_115], %363 {strides = array<i32>} : memref<1x8x128xf32, #tpu.memory_space<vmem>>, vector<1x1x128xf32>,
    }
    %c8_i32_14 = arith.constant 8 : i32
    %c1_i32_15 = arith.constant 1 : i32
    %15 = arith.cmpi eq, %arg2, %c1_i32_15 : i32
    %16 = arith.extui %15 : i1 to i32
    %c0_i32_16 = arith.constant 0 : i32
    %17 = arith.cmpi ne, %16, %c0_i32_16 : i32
    scf.if %17 {
      %c0_17 = arith.constant 0 : index
      %c0_18 = arith.constant 0 : index
      %c0_19 = arith.constant 0 : index
      %18 = vector.load %arg7[%c0_17, %c0_18, %c0_19] : memref<1x8x128xf32, #tpu.memory_space<vmem>>, vector<1x8x128xf32>
      %cst_20 = arith.constant 3.125000e-02 : f32
      %19 = vector.broadcast %cst_20 : f32 to vector<1x8x128xf32>
      %20 = arith.mulf %18, %19 : vector<1x8x128xf32>
      %c0_21 = arith.constant 0 : index
      %c0_22 = arith.constant 0 : index
      %c0_23 = arith.constant 0 : index
      %21 = vector.load %arg7[%c0_21, %c0_22, %c0_23] : memref<1x8x128xf32, #tpu.memory_space<vmem>>, vector<1x8x128xf32>
      tpu.vector_store %arg7[%c0_21, %c0_22, %c0_23], %20 {strides = array<i32>} : memref<1x8x128xf32, #tpu.memory_space<vmem>>, vector<1x8x128xf32>,
    } else {
    }
    return
  }
  func.func @transform_0(%arg0: i32, %arg1: i32, %arg2: i32) -> (i32, i32) {
    %c0_i32 = arith.constant 0 : i32
    %c0_i32_0 = arith.constant 0 : i32
    %c0_i32_1 = arith.constant 0 : i32
    return %c0_i32, %c0_i32_0 : i32, i32
  }
  func.func @transform_1(%arg0: i32, %arg1: i32, %arg2: i32) -> (i32, i32, i32) {
    %c0_i32 = arith.constant 0 : i32
    %c0_i32_0 = arith.constant 0 : i32
    return %arg0, %c0_i32, %arg1 : i32, i32, i32
  }
  func.func @transform_2(%arg0: i32, %arg1: i32, %arg2: i32) -> (i32, i32, i32, i32) {
    %c0_i32 = arith.constant 0 : i32
    %c0_i32_0 = arith.constant 0 : i32
    %c0_i32_1 = arith.constant 0 : i32
    return %arg0, %arg2, %c0_i32, %c0_i32_0 : i32, i32, i32, i32
  }
  func.func @transform_3(%arg0: i32, %arg1: i32, %arg2: i32) -> (i32, i32, i32, i32) {
    %c0_i32 = arith.constant 0 : i32
    %c0_i32_0 = arith.constant 0 : i32
    return %arg0, %arg2, %c0_i32, %arg1 : i32, i32, i32, i32
  }
  func.func @transform_4(%arg0: i32, %arg1: i32, %arg2: i32) -> (i32, i32, i32) {
    %c0_i32 = arith.constant 0 : i32
    %c0_i32_0 = arith.constant 0 : i32
    return %arg0, %c0_i32, %arg1 : i32, i32, i32
  }
}

</mosaic_0001>

<llo_original>
// kernel: tpu_custom_call.1
$region0: #{tpu_custom_call.1}
  #allocation0 [shape = 'u32[]', space=smem, size = 0x4, offset = 0x4, fixed_abs, tag = 'smem constant byte address 0x4 - core index']
  #allocation1 [shape = 'u32[144,128]{1,0:T(1,128)}', space=vmem, size = 0x12000, scoped, tag = 'internal scratch']
  #allocation2 [shape = 'f32[256,128]{1,0:T(8,128)}', space=vmem, size = 0x20000, scoped, tag = 'scratch operand']
  %s0 = inlined_call_operand.hbm [shape: f32[2,8], index: 0, kind: input, shape index: {}]
  %s1 = inlined_call_operand.hbm [shape: bf16[2,16,256], index: 1, kind: input, shape index: {}]
  %s2 = inlined_call_operand.hbm [shape: bf16[2,2,16,256], index: 2, kind: input, shape index: {}]
  %s3 = inlined_call_operand.hbm [shape: f32[2,2,8,256], index: 3, kind: input, shape index: {}]
  %s4 = inlined_call_operand.hbm [shape: f32[2,8,256], index: 4, kind: output, shape index: {}]
  %s5 = sld [smem:[#allocation0]]
  $region80: #{tpu_custom_call.1} parent=0
    _
  %s7 = ssub.s32 1, %s5
  %s8 = scalar_select 0, %s7, %s5
  $region1: #{tpu_custom_call.1} parent=0
    #allocation3 [shape = 'u8[1024]{0}', space=smem, size = 0x400, scoped, tag = 'input window, operand 0, single buffered']
    #allocation4 [shape = 's32[2]{0}', space=sflag, size = 0x8, scoped, tag = 'scoped memory for tpu_custom_call.1']
    #allocation5 [shape = 's32[2]{0}', space=sflag, size = 0x8, scoped, tag = 'scoped memory for tpu_custom_call.1']
    #allocation6 [shape = 's32[2]{0}', space=sflag, size = 0x8, scoped, tag = 'scoped memory for tpu_custom_call.1']
    #allocation7 [shape = 'u8[8192]{0}', space=vmem, size = 0x2000, scoped, tag = 'input window, operand 1']
    #allocation8 [shape = 'u8[16384]{0}', space=vmem, size = 0x4000, scoped, tag = 'input window, operand 2']
    #allocation9 [shape = 's32[2]{0}', space=sflag, size = 0x8, scoped, tag = 'scoped memory for tpu_custom_call.1']
    #allocation10 [shape = 'u8[8192]{0}', space=vmem, size = 0x2000, scoped, tag = 'input window, operand 3']
    #allocation11 [shape = 'u8[8192]{0}', space=vmem, size = 0x2000, scoped, tag = 'output window, operand 0']
    %9 = vsyncpa [#allocation6], 0
    %10 = vsyncpa [#allocation4], 0
    %s11 = scalar_lea.sflag [#allocation4], 1
    %12 = vsyncpa %s11, 0
    %13 = vsyncpa [#allocation9], 0
    %s14 = scalar_lea.sflag [#allocation9], 1
    %15 = vsyncpa %s14, 0
    %16 = vsyncpa [#allocation5], 0
    %s17 = scalar_lea.sflag [#allocation5], 1
    %18 = vsyncpa %s17, 0
    loop: start=0, step=1, limit=10
    $region2: #{tpu_custom_call.1} parent=1 // loop_pre_header
      _
    $region3: #{tpu_custom_call.1} parent=1 // loop_header
      %s20 = sphi 0, %s24
      %p21 = scmp.ge.s32.totalorder %s20, 10
      %s27 = sphi 0, %s46
      %s28 = sphi 0, %s42
      %s29 = sphi 0, %s38
      %s30 = sphi 0, %s27
      %s31 = sphi 0, %s28
      %s32 = sphi 0, %s29
      %s33 = sphi 0, %s30
      %s34 = sphi 0, %s31
      %s35 = sphi 0, %s32
      %s47 = sphi 0, %s47
      %s49 = sphi 0, %s47
      %s50 = sphi 0, %s49
      %s64 = sphi 0, %s50
      %s72 = sphi 0, %s74
      %s75 = sphi 0, %s72
      %s76 = sphi 0, %s75
      %s92 = sphi 0, %s76
      %s100 = sphi 0, %s102
      %s103 = sphi 0, %s100
      %s104 = sphi 0, %s103
      %s120 = sphi 0, %s104
      %s130 = sphi 0, %s132
      %s133 = sphi 0, %s130
      %s134 = sphi 0, %s133
      %s150 = sphi 0, %s134
      %s158 = sphi 0, %s160
      %s161 = sphi 0, %s158
      %s162 = sphi 0, %s161
      %s178 = sphi 0, %s162
    $region4: #{tpu_custom_call.1} parent=1 // loop_header_branch
      %23 = sbr.rel (%p21) target = $region8
    $region5: #{tpu_custom_call.1} parent=1 // loop_body
      %s25 = ssub.s32 %s20, 1
      %s26 = ssub.s32 %s20, 2
      %s36 = sadd.s32 1, %s29
      %p37 = scmp.ge.s32.totalorder %s36, 2
      %s38 = scalar_select %p37, 0, %s36
      %s39 = sadd.s32 1, %s28
      %s40 = scalar_select %p37, %s39, %s28
      %p41 = scmp.ge.s32.totalorder %s40, 2
      %s42 = scalar_select %p41, 0, %s40
      %s43 = sadd.s32 1, %s27
      %s44 = scalar_select %p41, %s43, %s27
      %p45 = scmp.ge.s32.totalorder %s44, 2
      %s46 = scalar_select %p45, 0, %s44
      %s48 = sadd.s32 %s47, 1
      %p51 = scmp.eq.s32.totalorder %s20, 7
      %p52 = scmp.ne.s32.totalorder %s47, %s49
      %p53 = scmp.eq.s32.totalorder %s20, 0
      %p54 = por %p52, %p53
      %p55 = scmp.ne.s32.totalorder %s47, %s49
      %p56 = scmp.eq.s32.totalorder %s25, 7
      %p57 = por %p55, %p56
      %p58 = scmp.ne.s32.totalorder %s49, %s50
      %p59 = scmp.eq.s32.totalorder %s25, 0
      %p60 = por %p58, %p59
      %p61 = scmp.ne.s32.totalorder %s49, %s50
      %p62 = scmp.eq.s32.totalorder %s26, 7
      %p63 = por %p61, %p62
      %p65 = scmp.ne.s32.totalorder %s50, %s64
      %p66 = scmp.eq.s32.totalorder %s26, 0
      %p67 = por %p65, %p66
      %s68 = ssub.s32 %s27, %s46
      %s69 = ssub.s32 %s28, %s42
      %s70 = sor.u32 %s68, %s69
      %p71 = scmp.eq.s32.totalorder %s70, 0
      %s73 = sadd.s32 %s72, 1
      %s74 = scalar_select %p71, %s72, %s73
      %p77 = pneg %p71
      %p78 = scmp.eq.s32.totalorder %s20, 7
      %p79 = por %p77, %p78
      %p80 = scmp.ne.s32.totalorder %s72, %s75
      %p81 = scmp.eq.s32.totalorder %s20, 0
      %p82 = por %p80, %p81
      %p83 = scmp.ne.s32.totalorder %s72, %s75
      %p84 = scmp.eq.s32.totalorder %s25, 7
      %p85 = por %p83, %p84
      %p86 = scmp.ne.s32.totalorder %s75, %s76
      %p87 = scmp.eq.s32.totalorder %s25, 0
      %p88 = por %p86, %p87
      %p89 = scmp.ne.s32.totalorder %s75, %s76
      %p90 = scmp.eq.s32.totalorder %s26, 7
      %p91 = por %p89, %p90
      %p93 = scmp.ne.s32.totalorder %s76, %s92
      %p94 = scmp.eq.s32.totalorder %s26, 0
      %p95 = por %p93, %p94
      %s96 = ssub.s32 %s27, %s46
      %s97 = ssub.s32 %s29, %s38
      %s98 = sor.u32 %s96, %s97
      %p99 = scmp.eq.s32.totalorder %s98, 0
      %s101 = sadd.s32 %s100, 1
      %s102 = scalar_select %p99, %s100, %s101
      %p105 = pneg %p99
      %p106 = scmp.eq.s32.totalorder %s20, 7
      %p107 = por %p105, %p106
      %p108 = scmp.ne.s32.totalorder %s100, %s103
      %p109 = scmp.eq.s32.totalorder %s20, 0
      %p110 = por %p108, %p109
      %p111 = scmp.ne.s32.totalorder %s100, %s103
      %p112 = scmp.eq.s32.totalorder %s25, 7
      %p113 = por %p111, %p112
      %p114 = scmp.ne.s32.totalorder %s103, %s104
      %p115 = scmp.eq.s32.totalorder %s25, 0
      %p116 = por %p114, %p115
      %p117 = scmp.ne.s32.totalorder %s103, %s104
      %p118 = scmp.eq.s32.totalorder %s26, 7
      %p119 = por %p117, %p118
      %p121 = scmp.ne.s32.totalorder %s104, %s120
      %p122 = scmp.eq.s32.totalorder %s26, 0
      %p123 = por %p121, %p122
      %s124 = ssub.s32 %s27, %s46
      %s125 = ssub.s32 %s29, %s38
      %s126 = sor.u32 %s124, %s125
      %s127 = ssub.s32 %s28, %s42
      %s128 = sor.u32 %s126, %s127
      %p129 = scmp.eq.s32.totalorder %s128, 0
      %s131 = sadd.s32 %s130, 1
      %s132 = scalar_select %p129, %s130, %s131
      %p135 = pneg %p129
      %p136 = scmp.eq.s32.totalorder %s20, 7
      %p137 = por %p135, %p136
      %p138 = scmp.ne.s32.totalorder %s130, %s133
      %p139 = scmp.eq.s32.totalorder %s20, 0
      %p140 = por %p138, %p139
      %p141 = scmp.ne.s32.totalorder %s130, %s133
      %p142 = scmp.eq.s32.totalorder %s25, 7
      %p143 = por %p141, %p142
      %p144 = scmp.ne.s32.totalorder %s133, %s134
      %p145 = scmp.eq.s32.totalorder %s25, 0
      %p146 = por %p144, %p145
      %p147 = scmp.ne.s32.totalorder %s133, %s134
      %p148 = scmp.eq.s32.totalorder %s26, 7
      %p149 = por %p147, %p148
      %p151 = scmp.ne.s32.totalorder %s134, %s150
      %p152 = scmp.eq.s32.totalorder %s26, 0
      %p153 = por %p151, %p152
      %s154 = ssub.s32 %s27, %s46
      %s155 = ssub.s32 %s28, %s42
      %s156 = sor.u32 %s154, %s155
      %p157 = scmp.eq.s32.totalorder %s156, 0
      %s159 = sadd.s32 %s158, 1
      %s160 = scalar_select %p157, %s158, %s159
      %p163 = pneg %p157
      %p164 = scmp.eq.s32.totalorder %s20, 7
      %p165 = por %p163, %p164
      %p166 = scmp.ne.s32.totalorder %s158, %s161
      %p167 = scmp.eq.s32.totalorder %s20, 0
      %p168 = por %p166, %p167
      %p169 = scmp.ne.s32.totalorder %s158, %s161
      %p170 = scmp.eq.s32.totalorder %s25, 7
      %p171 = por %p169, %p170
      %p172 = scmp.ne.s32.totalorder %s161, %s162
      %p173 = scmp.eq.s32.totalorder %s25, 0
      %p174 = por %p172, %p173
      %p175 = scmp.ne.s32.totalorder %s161, %s162
      %p176 = scmp.eq.s32.totalorder %s26, 7
      %p177 = por %p175, %p176
      %p179 = scmp.ne.s32.totalorder %s162, %s178
      %p180 = scmp.eq.s32.totalorder %s26, 0
      %p181 = por %p179, %p180
      %p182 = scmp.le.s32.totalorder 1, %s20
      %p183 = scmp.lt.s32.totalorder %s20, 9
      %p184 = pnand %p182, %p183
      %p185 = pneg %p184
      // Predicated region
      $region9: #{tpu_custom_call.1} parent=5 // pred_check
        _
      $region10: #{tpu_custom_call.1} parent=5 // pred_check_branch
        %187 = sbr.rel (%p184) target = $region12
      $region11: #{tpu_custom_call.1} parent=5 // pred_region
        %s188 = ssub.s32 %s20, 1
        // Predicated region
        $region13: #{tpu_custom_call.1} parent=11 // pred_check
          %p189 = pneg %p60
        $region14: #{tpu_custom_call.1} parent=11 // pred_check_branch
          %191 = sbr.rel (%p189) target = $region16
        $region15: #{tpu_custom_call.1} parent=11 // pred_region
          %s193 = ssub.s32 32, 32
          %194 = vsyncadd [#allocation6], %s193
          %197 = dma.hbm_to_smem %s0, 32, [#allocation3], [#allocation6]
        $region16: #{tpu_custom_call.1} parent=11 // pred_fallthru
          _
      $region12: #{tpu_custom_call.1} parent=5 // pred_fallthru
        _
      %p198 = scmp.lt.s32.totalorder %s20, 8
      // Predicated region
      $region17: #{tpu_custom_call.1} parent=5 // pred_check
        %p199 = pneg %p198
      $region18: #{tpu_custom_call.1} parent=5 // pred_check_branch
        %201 = sbr.rel (%p199) target = $region20
      $region19: #{tpu_custom_call.1} parent=5 // pred_region
        // Predicated region
        $region21: #{tpu_custom_call.1} parent=19 // pred_check
          %p202 = pneg %p82
        $region22: #{tpu_custom_call.1} parent=19 // pred_check_branch
          %204 = sbr.rel (%p202) target = $region24
        $region23: #{tpu_custom_call.1} parent=19 // pred_region
          %s205 = sand.u32 %s72, 1
          %s206 = scalar_lea.sflag [#allocation4], %s205
          %s207 = sand.u32 %s72, 1
          %s208 = smul.addr %s207, 8
          %s209 = scalar_lea.vmem [#allocation7], %s208
          %s211 = ssub.s32 128, 128
          %212 = vsyncadd %s206, %s211
          %s213 = smul.addr %s27, 4
          %s214 = sadd.s32 %s28, %s213
          %s215 = smul.addr %s214, 64
          %s216 = scalar_lea.hbm %s1, %s215
          %s217 = sshll.u32 %s209, 4
          %s218 = int_to_ptr.vmem [resolvable:$true] %s217
          %223 = dma.hbm_to_vmem [thread:$0]  %s216, 128, %s218, %s206, 128, 64, 4
        $region24: #{tpu_custom_call.1} parent=19 // pred_fallthru
          _
        // Predicated region
        $region25: #{tpu_custom_call.1} parent=19 // pred_check
          %p224 = pneg %p110
        $region26: #{tpu_custom_call.1} parent=19 // pred_check_branch
          %226 = sbr.rel (%p224) target = $region28
        $region27: #{tpu_custom_call.1} parent=19 // pred_region
          %s227 = sand.u32 %s20, 1
          %s228 = scalar_lea.sflag [#allocation9], %s227
          %s229 = sand.u32 %s100, 1
          %s230 = smul.addr %s229, 16
          %s231 = scalar_lea.vmem [#allocation8], %s230
          %s233 = ssub.s32 256, 256
          %234 = vsyncadd %s228, %s233
          %s235 = smul.addr %s29, 4
          %s236 = smul.addr %s27, 8
          %s237 = sadd.s32 %s235, %s236
          %s238 = smul.addr %s237, 64
          %s239 = scalar_lea.hbm %s2, %s238
          %s240 = sshll.u32 %s231, 4
          %s241 = int_to_ptr.vmem [resolvable:$true] %s240
          %246 = dma.hbm_to_vmem [thread:$0]  %s239, 256, %s241, %s228, 128, 128, 8
        $region28: #{tpu_custom_call.1} parent=19 // pred_fallthru
          _
        // Predicated region
        $region29: #{tpu_custom_call.1} parent=19 // pred_check
          %p247 = pneg %p140
        $region30: #{tpu_custom_call.1} parent=19 // pred_check_branch
          %249 = sbr.rel (%p247) target = $region32
        $region31: #{tpu_custom_call.1} parent=19 // pred_region
          %s250 = sand.u32 %s20, 1
          %s251 = scalar_lea.sflag [#allocation9], %s250
          %s252 = sand.u32 %s130, 1
          %s253 = smul.addr %s252, 8
          %s254 = scalar_lea.vmem [#allocation10], %s253
          %s256 = ssub.s32 128, 128
          %257 = vsyncadd %s251, %s256
          %s258 = smul.addr %s29, 2
          %s259 = sadd.s32 %s28, %s258
          %s260 = smul.addr %s27, 4
          %s261 = sadd.s32 %s259, %s260
          %s262 = smul.addr %s261, 128
          %s263 = scalar_lea.hbm %s3, %s262
          %s265 = sshll.u32 %s254, 4
          %s266 = int_to_ptr.vmem [resolvable:$true] %s265
          %268 = dma.hbm_to_vmem [thread:$0]  %s263, 128, %s266, %s251
        $region32: #{tpu_custom_call.1} parent=19 // pred_fallthru
          _
      $region20: #{tpu_custom_call.1} parent=5 // pred_fallthru
        _
      %p269 = scmp.le.s32.totalorder 1, %s20
      %p270 = scmp.lt.s32.totalorder %s20, 9
      %p271 = pnand %p269, %p270
      %p272 = pneg %p271
      // Predicated region
      $region33: #{tpu_custom_call.1} parent=5 // pred_check
        _
      $region34: #{tpu_custom_call.1} parent=5 // pred_check_branch
        %274 = sbr.rel (%p271) target = $region36
      $region35: #{tpu_custom_call.1} parent=5 // pred_region
        %s275 = ssub.s32 %s20, 1
        // Predicated region
        $region37: #{tpu_custom_call.1} parent=35 // pred_check
          %p276 = pneg %p60
        $region38: #{tpu_custom_call.1} parent=35 // pred_check_branch
          %278 = sbr.rel (%p276) target = $region40
        $region39: #{tpu_custom_call.1} parent=35 // pred_region
          %279 = dma.done [#allocation6], 32
        $region40: #{tpu_custom_call.1} parent=35 // pred_fallthru
          _
        %s280 = sand.u32 %s75, 1
        %s281 = scalar_lea.sflag [#allocation4], %s280
        %s282 = sand.u32 %s75, 1
        %s283 = smul.addr %s282, 8
        %s284 = scalar_lea.vmem [#allocation7], %s283
        // Predicated region
        $region41: #{tpu_custom_call.1} parent=35 // pred_check
          %p285 = pneg %p88
        $region42: #{tpu_custom_call.1} parent=35 // pred_check_branch
          %287 = sbr.rel (%p285) target = $region44
        $region43: #{tpu_custom_call.1} parent=35 // pred_region
          %288 = dma.done %s281, 128
        $region44: #{tpu_custom_call.1} parent=35 // pred_fallthru
          _
        %s289 = sand.u32 %s25, 1
        %s290 = scalar_lea.sflag [#allocation9], %s289
        %s291 = sand.u32 %s103, 1
        %s292 = smul.addr %s291, 16
        %s293 = scalar_lea.vmem [#allocation8], %s292
        // Predicated region
        $region45: #{tpu_custom_call.1} parent=35 // pred_check
          %p294 = pneg %p116
        $region46: #{tpu_custom_call.1} parent=35 // pred_check_branch
          %296 = sbr.rel (%p294) target = $region48
        $region47: #{tpu_custom_call.1} parent=35 // pred_region
          %297 = dma.done %s290, 256
        $region48: #{tpu_custom_call.1} parent=35 // pred_fallthru
          _
        %s298 = sand.u32 %s25, 1
        %s299 = scalar_lea.sflag [#allocation9], %s298
        %s300 = sand.u32 %s133, 1
        %s301 = smul.addr %s300, 8
        %s302 = scalar_lea.vmem [#allocation10], %s301
        // Predicated region
        $region49: #{tpu_custom_call.1} parent=35 // pred_check
          %p303 = pneg %p146
        $region50: #{tpu_custom_call.1} parent=35 // pred_check_branch
          %305 = sbr.rel (%p303) target = $region52
        $region51: #{tpu_custom_call.1} parent=35 // pred_region
          %306 = dma.done %s299, 128
        $region52: #{tpu_custom_call.1} parent=35 // pred_fallthru
          _
        %307 = sfence
        %p308 = pneg %p60
        %p309 = pneg %p57
        %s310 = sand.u32 %s75, 1
        %s311 = scalar_lea.sflag [#allocation4], %s310
        %s312 = sand.u32 %s75, 1
        %s313 = smul.addr %s312, 8
        %s314 = scalar_lea.vmem [#allocation7], %s313
        %p315 = pneg %p88
        %p316 = pneg %p85
        %s317 = sand.u32 %s25, 1
        %s318 = scalar_lea.sflag [#allocation9], %s317
        %s319 = sand.u32 %s103, 1
        %s320 = smul.addr %s319, 16
        %s321 = scalar_lea.vmem [#allocation8], %s320
        %p322 = pneg %p116
        %p323 = pneg %p113
        %s324 = sand.u32 %s25, 1
        %s325 = scalar_lea.sflag [#allocation9], %s324
        %s326 = sand.u32 %s133, 1
        %s327 = smul.addr %s326, 8
        %s328 = scalar_lea.vmem [#allocation10], %s327
        %p329 = pneg %p146
        %p330 = pneg %p143
        %p331 = pneg %p174
        %p332 = pneg %p171
        %s333 = sand.u32 %s161, 1
        %s334 = scalar_lea.sflag [#allocation5], %s333
        %s335 = sand.u32 %s161, 1
        %s336 = smul.addr %s335, 8
        %s337 = scalar_lea.vmem [#allocation11], %s336
        %p339 = scmp.eq.s32.totalorder %s32, 0
        // Predicated region
        $region53: #{tpu_custom_call.1} parent=35 // pred_check
          %p340 = pneg %p339
        $region54: #{tpu_custom_call.1} parent=35 // pred_check_branch
          %342 = sbr.rel (%p340) target = $region56
        $region55: #{tpu_custom_call.1} parent=35 // pred_region
          %343 = vst [vmem:[%s337] sm:$0xff] 0.0
        $region56: #{tpu_custom_call.1} parent=35 // pred_fallthru
          _
        %v344 = vld [vmem:[%s293] sm:$0xff]
        %v345 = vld [vmem:[%s293 + $0x8] sm:$0xff]
        %v346 = vld [vmem:[%s284] sm:$0xf]
        %v347 = vld [vmem:[%s284 + $0x4] sm:$0xf]
        %v350 = vunpack.c.l.b16 %v344
        %v351 = vunpack.c.h.b16 %v344
        %v352 = vunpack.c.l.b16 %v345
        %v353 = vunpack.c.h.b16 %v345
        %v354 = vpack.c.b16 %v352, %v350
        %v355 = vpack.c.b16 %v353, %v351
        %358 = vxpose.xlu0.c.b16.start [1/8] %v354, 128
        %359 = vxpose.xlu0.c.b16.cont [2/8] 0, 128
        %360 = vxpose.xlu0.c.b16.cont [3/8] 0, 128
        %361 = vxpose.xlu0.c.b16.cont [4/8] 0, 128
        %362 = vxpose.xlu0.c.b16.cont [5/8] 0, 128
        %363 = vxpose.xlu0.c.b16.cont [6/8] 0, 128
        %364 = vxpose.xlu0.c.b16.cont [7/8] 0, 128
        %365 = vxpose.xlu0.c.b16.end [8/8] 0, 128
        %v366 = vpop.trf.xlu0
        %v367 = vpop.trf.xlu0
        %v368 = vpop.trf.xlu0
        %v369 = vpop.trf.xlu0
        %v370 = vpop.trf.xlu0
        %v371 = vpop.trf.xlu0
        %v372 = vpop.trf.xlu0
        %v373 = vpop.trf.xlu0
        %374 = vxpose.xlu0.c.b16.start [1/8] %v355, 128
        %375 = vxpose.xlu0.c.b16.cont [2/8] 0, 128
        %376 = vxpose.xlu0.c.b16.cont [3/8] 0, 128
        %377 = vxpose.xlu0.c.b16.cont [4/8] 0, 128
        %378 = vxpose.xlu0.c.b16.cont [5/8] 0, 128
        %379 = vxpose.xlu0.c.b16.cont [6/8] 0, 128
        %380 = vxpose.xlu0.c.b16.cont [7/8] 0, 128
        %381 = vxpose.xlu0.c.b16.end [8/8] 0, 128
        %v382 = vpop.trf.xlu0
        %v383 = vpop.trf.xlu0
        %v384 = vpop.trf.xlu0
        %v385 = vpop.trf.xlu0
        %v386 = vpop.trf.xlu0
        %v387 = vpop.trf.xlu0
        %v388 = vpop.trf.xlu0
        %v389 = vpop.trf.xlu0
        %v392 = vunpack.c.l.b16 %v346
        %v393 = vunpack.c.l.b16 %v347
        %v394 = vpack.c.b16 %v393, %v392
        %vm396 = vcmask 130048
        %v398 = vsel %vm396, %v366, 0
        %v401 = vsel %vm396, %v367, 0
        %v404 = vsel %vm396, %v368, 0
        %v407 = vsel %vm396, %v369, 0
        %v410 = vsel %vm396, %v370, 0
        %v413 = vsel %vm396, %v371, 0
        %v416 = vsel %vm396, %v372, 0
        %v419 = vsel %vm396, %v373, 0
        %v422 = vsel %vm396, %v382, 0
        %v425 = vsel %vm396, %v383, 0
        %v428 = vsel %vm396, %v384, 0
        %v431 = vsel %vm396, %v385, 0
        %v434 = vsel %vm396, %v386, 0
        %v437 = vsel %vm396, %v387, 0
        %v440 = vsel %vm396, %v388, 0
        %v443 = vsel %vm396, %v389, 0
        %445 = vmatprep.subr.bf16.mxu0 0
        %446 = vmatpush1.bf16.msra.mxu0 %v394
        %447 = vmatprep.subr.bf16.mxu0 0
        %448 = vmatpush1.bf16.msra.mxu0 0
        %449 = vmatprep.subr.bf16.mxu0 0
        %450 = vmatpush1.bf16.msra.mxu0 0
        %451 = vmatprep.subr.bf16.mxu0 0
        %452 = vmatpush1.bf16.msra.mxu0 0
        %453 = vmatprep.subr.bf16.mxu0 0
        %454 = vmatpush1.bf16.msra.mxu0 0
        %455 = vmatprep.subr.bf16.mxu0 0
        %456 = vmatpush1.bf16.msra.mxu0 0
        %457 = vmatprep.subr.bf16.mxu0 0
        %458 = vmatpush1.bf16.msra.mxu0 0
        %459 = vmatprep.subr.bf16.mxu0 0
        %460 = vmatpush1.bf16.msra.mxu0 0
        %461 = vmatprep.subr.bf16.mxu0 0
        %462 = vmatpush1.bf16.msra.mxu0 0
        %463 = vmatprep.subr.bf16.mxu0 0
        %464 = vmatpush1.bf16.msra.mxu0 0
        %465 = vmatprep.subr.bf16.mxu0 0
        %466 = vmatpush1.bf16.msra.mxu0 0
        %467 = vmatprep.subr.bf16.mxu0 0
        %468 = vmatpush1.bf16.msra.mxu0 0
        %469 = vmatprep.subr.bf16.mxu0 0
        %470 = vmatpush1.bf16.msra.mxu0 0
        %471 = vmatprep.subr.bf16.mxu0 0
        %472 = vmatpush1.bf16.msra.mxu0 0
        %473 = vmatprep.subr.bf16.mxu0 0
        %474 = vmatpush1.bf16.msra.mxu0 0
        %475 = vmatprep.subr.bf16.mxu0 0
        %476 = vmatpush1.bf16.msra.mxu0 0
        %477 = vmatprep.mubr.bf16.mxu0 0
        %478 = vmatmul.mubr.bf16.gmra.mrb[0].mxu0 %v398
        %v479 = vpop.f32.mrb[0].mxu0
        %v480 = vadd.f32 0.0, %v479
        %v481 = vpop.f32.mrb[0].mxu0
        %v482 = vpop.f32.mrb[0].mxu0
        %v483 = vadd.f32 0.0, %v482
        %v484 = vpop.f32.mrb[0].mxu0
        %485 = vmatprep.mubr.bf16.mxu0 0
        %486 = vmatmul.mubr.bf16.gmra.mrb[0].mxu0 %v401
        %v487 = vpop.f32.mrb[0].mxu0
        %v488 = vadd.f32 0.0, %v487
        %v489 = vpop.f32.mrb[0].mxu0
        %v490 = vpop.f32.mrb[0].mxu0
        %v491 = vadd.f32 0.0, %v490
        %v492 = vpop.f32.mrb[0].mxu0
        %493 = vmatprep.mubr.bf16.mxu0 0
        %494 = vmatmul.mubr.bf16.gmra.mrb[0].mxu0 %v404
        %v495 = vpop.f32.mrb[0].mxu0
        %v496 = vadd.f32 0.0, %v495
        %v497 = vpop.f32.mrb[0].mxu0
        %v498 = vpop.f32.mrb[0].mxu0
        %v499 = vadd.f32 0.0, %v498
        %v500 = vpop.f32.mrb[0].mxu0
        %501 = vmatprep.mubr.bf16.mxu0 0
        %502 = vmatmul.mubr.bf16.gmra.mrb[0].mxu0 %v407
        %v503 = vpop.f32.mrb[0].mxu0
        %v504 = vadd.f32 0.0, %v503
        %v505 = vpop.f32.mrb[0].mxu0
        %v506 = vpop.f32.mrb[0].mxu0
        %v507 = vadd.f32 0.0, %v506
        %v508 = vpop.f32.mrb[0].mxu0
        %509 = vmatprep.mubr.bf16.mxu0 0
        %510 = vmatmul.mubr.bf16.gmra.mrb[0].mxu0 %v410
        %v511 = vpop.f32.mrb[0].mxu0
        %v512 = vadd.f32 0.0, %v511
        %v513 = vpop.f32.mrb[0].mxu0
        %v514 = vpop.f32.mrb[0].mxu0
        %v515 = vadd.f32 0.0, %v514
        %v516 = vpop.f32.mrb[0].mxu0
        %517 = vmatprep.mubr.bf16.mxu0 0
        %518 = vmatmul.mubr.bf16.gmra.mrb[0].mxu0 %v413
        %v519 = vpop.f32.mrb[0].mxu0
        %v520 = vadd.f32 0.0, %v519
        %v521 = vpop.f32.mrb[0].mxu0
        %v522 = vpop.f32.mrb[0].mxu0
        %v523 = vadd.f32 0.0, %v522
        %v524 = vpop.f32.mrb[0].mxu0
        %525 = vmatprep.mubr.bf16.mxu0 0
        %526 = vmatmul.mubr.bf16.gmra.mrb[0].mxu0 %v416
        %v527 = vpop.f32.mrb[0].mxu0
        %v528 = vadd.f32 0.0, %v527
        %v529 = vpop.f32.mrb[0].mxu0
        %v530 = vpop.f32.mrb[0].mxu0
        %v531 = vadd.f32 0.0, %v530
        %v532 = vpop.f32.mrb[0].mxu0
        %533 = vmatprep.mubr.bf16.mxu0 0
        %534 = vmatmul.mubr.bf16.gmra.mrb[0].mxu0 %v419
        %v535 = vpop.f32.mrb[0].mxu0
        %v536 = vadd.f32 0.0, %v535
        %v537 = vpop.f32.mrb[0].mxu0
        %v538 = vpop.f32.mrb[0].mxu0
        %v539 = vadd.f32 0.0, %v538
        %v540 = vpop.f32.mrb[0].mxu0
        %541 = vmatprep.mubr.bf16.mxu0 0
        %542 = vmatmul.mubr.bf16.gmra.mrb[0].mxu0 %v422
        %v543 = vpop.f32.mrb[0].mxu0
        %v544 = vadd.f32 0.0, %v543
        %v545 = vpop.f32.mrb[0].mxu0
        %v546 = vpop.f32.mrb[0].mxu0
        %v547 = vadd.f32 0.0, %v546
        %v548 = vpop.f32.mrb[0].mxu0
        %549 = vmatprep.mubr.bf16.mxu0 0
        %550 = vmatmul.mubr.bf16.gmra.mrb[0].mxu0 %v425
        %v551 = vpop.f32.mrb[0].mxu0
        %v552 = vadd.f32 0.0, %v551
        %v553 = vpop.f32.mrb[0].mxu0
        %v554 = vpop.f32.mrb[0].mxu0
        %v555 = vadd.f32 0.0, %v554
        %v556 = vpop.f32.mrb[0].mxu0
        %557 = vmatprep.mubr.bf16.mxu0 0
        %558 = vmatmul.mubr.bf16.gmra.mrb[0].mxu0 %v428
        %v559 = vpop.f32.mrb[0].mxu0
        %v560 = vadd.f32 0.0, %v559
        %v561 = vpop.f32.mrb[0].mxu0
        %v562 = vpop.f32.mrb[0].mxu0
        %v563 = vadd.f32 0.0, %v562
        %v564 = vpop.f32.mrb[0].mxu0
        %565 = vmatprep.mubr.bf16.mxu0 0
        %566 = vmatmul.mubr.bf16.gmra.mrb[0].mxu0 %v431
        %v567 = vpop.f32.mrb[0].mxu0
        %v568 = vadd.f32 0.0, %v567
        %v569 = vpop.f32.mrb[0].mxu0
        %v570 = vpop.f32.mrb[0].mxu0
        %v571 = vadd.f32 0.0, %v570
        %v572 = vpop.f32.mrb[0].mxu0
        %573 = vmatprep.mubr.bf16.mxu0 0
        %574 = vmatmul.mubr.bf16.gmra.mrb[0].mxu0 %v434
        %v575 = vpop.f32.mrb[0].mxu0
        %v576 = vadd.f32 0.0, %v575
        %v577 = vpop.f32.mrb[0].mxu0
        %v578 = vpop.f32.mrb[0].mxu0
        %v579 = vadd.f32 0.0, %v578
        %v580 = vpop.f32.mrb[0].mxu0
        %581 = vmatprep.mubr.bf16.mxu0 0
        %582 = vmatmul.mubr.bf16.gmra.mrb[0].mxu0 %v437
        %v583 = vpop.f32.mrb[0].mxu0
        %v584 = vadd.f32 0.0, %v583
        %v585 = vpop.f32.mrb[0].mxu0
        %v586 = vpop.f32.mrb[0].mxu0
        %v587 = vadd.f32 0.0, %v586
        %v588 = vpop.f32.mrb[0].mxu0
        %589 = vmatprep.mubr.bf16.mxu0 0
        %590 = vmatmul.mubr.bf16.gmra.mrb[0].mxu0 %v440
        %v591 = vpop.f32.mrb[0].mxu0
        %v592 = vadd.f32 0.0, %v591
        %v593 = vpop.f32.mrb[0].mxu0
        %v594 = vpop.f32.mrb[0].mxu0
        %v595 = vadd.f32 0.0, %v594
        %v596 = vpop.f32.mrb[0].mxu0
        %597 = vmatprep.mubr.bf16.mxu0 0
        %598 = vmatmul.mubr.bf16.gmra.mrb[0].mxu0 %v443
        %v599 = vpop.f32.mrb[0].mxu0
        %v600 = vadd.f32 0.0, %v599
        %v601 = vpop.f32.mrb[0].mxu0
        %v602 = vpop.f32.mrb[0].mxu0
        %v603 = vadd.f32 0.0, %v602
        %v604 = vpop.f32.mrb[0].mxu0
        %605 = vdwg.mxu0
        %606 = vst [vmem:[#allocation2] sm:$0xff] %v480
        %607 = vst [vmem:[#allocation2 + $0x8] sm:$0xff] %v483
        %608 = vst [vmem:[#allocation2 + $0x10] sm:$0xff] %v488
        %609 = vst [vmem:[#allocation2 + $0x18] sm:$0xff] %v491
        %610 = vst [vmem:[#allocation2 + $0x20] sm:$0xff] %v496
        %611 = vst [vmem:[#allocation2 + $0x28] sm:$0xff] %v499
        %612 = vst [vmem:[#allocation2 + $0x30] sm:$0xff] %v504
        %613 = vst [vmem:[#allocation2 + $0x38] sm:$0xff] %v507
        %614 = vst [vmem:[#allocation2 + $0x40] sm:$0xff] %v512
        %615 = vst [vmem:[#allocation2 + $0x48] sm:$0xff] %v515
        %616 = vst [vmem:[#allocation2 + $0x50] sm:$0xff] %v520
        %617 = vst [vmem:[#allocation2 + $0x58] sm:$0xff] %v523
        %618 = vst [vmem:[#allocation2 + $0x60] sm:$0xff] %v528
        %619 = vst [vmem:[#allocation2 + $0x68] sm:$0xff] %v531
        %620 = vst [vmem:[#allocation2 + $0x70] sm:$0xff] %v536
        %621 = vst [vmem:[#allocation2 + $0x78] sm:$0xff] %v539
        %622 = vst [vmem:[#allocation2 + $0x80] sm:$0xff] %v544
        %623 = vst [vmem:[#allocation2 + $0x88] sm:$0xff] %v547
        %624 = vst [vmem:[#allocation2 + $0x90] sm:$0xff] %v552
        %625 = vst [vmem:[#allocation2 + $0x98] sm:$0xff] %v555
        %626 = vst [vmem:[#allocation2 + $0xa0] sm:$0xff] %v560
        %627 = vst [vmem:[#allocation2 + $0xa8] sm:$0xff] %v563
        %628 = vst [vmem:[#allocation2 + $0xb0] sm:$0xff] %v568
        %629 = vst [vmem:[#allocation2 + $0xb8] sm:$0xff] %v571
        %630 = vst [vmem:[#allocation2 + $0xc0] sm:$0xff] %v576
        %631 = vst [vmem:[#allocation2 + $0xc8] sm:$0xff] %v579
        %632 = vst [vmem:[#allocation2 + $0xd0] sm:$0xff] %v584
        %633 = vst [vmem:[#allocation2 + $0xd8] sm:$0xff] %v587
        %634 = vst [vmem:[#allocation2 + $0xe0] sm:$0xff] %v592
        %635 = vst [vmem:[#allocation2 + $0xe8] sm:$0xff] %v595
        %636 = vst [vmem:[#allocation2 + $0xf0] sm:$0xff] %v600
        %637 = vst [vmem:[#allocation2 + $0xf8] sm:$0xff] %v603
        %v638 = vld [vmem:[%s302] sm:$0xff]
        %v639 = vlaneseq
        %v640 = vshrl.u32 %v639, 7
        %v641 = vadd.s32 %v640, 8
        loop: start=0, step=1, limit=8
        $region57: #{tpu_custom_call.1} parent=35 // loop_pre_header
          _
        $region58: #{tpu_custom_call.1} parent=35 // loop_header
          %s643 = sphi 0, %s647
          %p644 = scmp.ge.s32.totalorder %s643, 8
        $region59: #{tpu_custom_call.1} parent=35 // loop_header_branch
          %646 = sbr.rel (%p644) target = $region63
        $region60: #{tpu_custom_call.1} parent=35 // loop_body
          %s648 = sshra.s32 %s643, 7
          %s649 = sand.u32 %s643, 127
          %s650 = sadd.s32 %s648, %s30
          %s651 = smul.u32 %s650, 128
          %s652 = sshra.s32 %s643, 7
          %s653 = sand.u32 %s643, 127
          %s654 = sadd.s32 %s651, %s653
          %s655 = sld [smem:[#allocation3 + %s654]]
          %v656 = vstv %s655
          %v657 = vmul.f32 %v656, %v638
          %v659 = vrot.slane %v638, 4
          %v661 = vadd.f32 %v657, %v659
          %v662 = vadd.f32 %v661, 1e-08
          %v663 = vrcp.pop %v662
          %v664 = vmul.f32 1.0, %v663
          %v666 = vrot.slane %v664, 2
          %v668 = vmul.f32 %v661, %v666
          %v669 = vrot.slane %v664, 1
          %v671 = vmul.f32 %v661, %v669
          %v672 = vsub.f32 %v668, 8.0
          %v673 = vrcp.pop 8.0
          %v674 = vmul.f32 %v672, %v673
          %v675 = vsub.f32 %v671, 8.0
          %v676 = vmul.f32 %v675, %v673
          %vm677 = vcmp.gt.f32.partialorder %v674, 1.0
          %vm678 = vcmp.lt.f32.partialorder %v674, -1.0
          %vm679 = vmor %vm677, %vm678
          %v680 = vsel %vm679, 2.0, %v674
          %vm681 = vcmp.gt.f32.partialorder %v676, 1.0
          %vm682 = vcmp.lt.f32.partialorder %v676, -1.0
          %vm683 = vmor %vm681, %vm682
          %v684 = vsel %vm683, 2.0, %v676
          %v685 = vadd.f32 %v680, 1.0
          %v686 = vmul.f32 %v685, 0.5
          %v687 = vmul.f32 %v686, 15.0
          %v688 = vadd.f32 %v684, 1.0
          %v689 = vmul.f32 %v688, 0.5
          %v690 = vmul.f32 %v689, 15.0
          %v691 = vfloor.f32 %v687
          %v692 = vfloor.f32 %v690
          %v693 = vsub.f32 %v687, %v691
          %v694 = vsub.f32 1.0, %v693
          %v695 = vsub.f32 %v690, %v692
          %v696 = vsub.f32 1.0, %v695
          %v697 = vcvt.f32.s32.to.zero.pseudo %v691
          %v698 = vcvt.f32.s32.to.zero.pseudo %v692
          %v699 = vadd.s32 %v697, 1
          %v700 = vadd.s32 %v698, 1
          %vm701 = vcmp.eq.s32.totalorder %v698, 0
          %v702 = vsel %vm701, %v696, 0.0
          %vm703 = vcmp.eq.s32.totalorder %v700, 0
          %v704 = vsel %vm703, %v695, 0.0
          %v705 = vadd.f32 %v702, %v704
          %v706 = vld [vmem:[#allocation2] sm:$0xff]
          %v707 = vld [vmem:[#allocation2 + $0x8] sm:$0xff]
          %v708 = vlaneseq
          %v709 = vshrl.u32 %v708, 7
          %v710 = vsub.s32 1, %v709
          %v711 = vrot.slane %v705, %v710
          %v712 = vmul.f32 %v711, %v706
          %v713 = vmul.f32 %v711, %v707
          %v714 = vadd.f32 %v712, 0.0
          %v715 = vadd.f32 %v713, 0.0
          %vm716 = vcmp.eq.s32.totalorder %v698, 1
          %v717 = vsel %vm716, %v696, 0.0
          %vm718 = vcmp.eq.s32.totalorder %v700, 1
          %v719 = vsel %vm718, %v695, 0.0
          %v720 = vadd.f32 %v717, %v719
          %s721 = scalar_lea.vmem [#allocation2], 16
          %v722 = vld [vmem:[%s721] sm:$0xff]
          %v723 = vld [vmem:[%s721 + $0x8] sm:$0xff]
          %v724 = vlaneseq
          %v725 = vshrl.u32 %v724, 7
          %v726 = vsub.s32 1, %v725
          %v727 = vrot.slane %v720, %v726
          %v728 = vmul.f32 %v727, %v722
          %v729 = vmul.f32 %v727, %v723
          %v730 = vadd.f32 %v714, %v728
          %v731 = vadd.f32 %v715, %v729
          %vm732 = vcmp.eq.s32.totalorder %v698, 2
          %v733 = vsel %vm732, %v696, 0.0
          %vm734 = vcmp.eq.s32.totalorder %v700, 2
          %v735 = vsel %vm734, %v695, 0.0
          %v736 = vadd.f32 %v733, %v735
          %s737 = scalar_lea.vmem [#allocation2], 32
          %v738 = vld [vmem:[%s737] sm:$0xff]
          %v739 = vld [vmem:[%s737 + $0x8] sm:$0xff]
          %v740 = vlaneseq
          %v741 = vshrl.u32 %v740, 7
          %v742 = vsub.s32 1, %v741
          %v743 = vrot.slane %v736, %v742
          %v744 = vmul.f32 %v743, %v738
          %v745 = vmul.f32 %v743, %v739
          %v746 = vadd.f32 %v730, %v744
          %v747 = vadd.f32 %v731, %v745
          %vm748 = vcmp.eq.s32.totalorder %v698, 3
          %v749 = vsel %vm748, %v696, 0.0
          %vm750 = vcmp.eq.s32.totalorder %v700, 3
          %v751 = vsel %vm750, %v695, 0.0
          %v752 = vadd.f32 %v749, %v751
          %s753 = scalar_lea.vmem [#allocation2], 48
          %v754 = vld [vmem:[%s753] sm:$0xff]
          %v755 = vld [vmem:[%s753 + $0x8] sm:$0xff]
          %v756 = vlaneseq
          %v757 = vshrl.u32 %v756, 7
          %v758 = vsub.s32 1, %v757
          %v759 = vrot.slane %v752, %v758
          %v760 = vmul.f32 %v759, %v754
          %v761 = vmul.f32 %v759, %v755
          %v762 = vadd.f32 %v746, %v760
          %v763 = vadd.f32 %v747, %v761
          %vm764 = vcmp.eq.s32.totalorder %v698, 4
          %v765 = vsel %vm764, %v696, 0.0
          %vm766 = vcmp.eq.s32.totalorder %v700, 4
          %v767 = vsel %vm766, %v695, 0.0
          %v768 = vadd.f32 %v765, %v767
          %s769 = scalar_lea.vmem [#allocation2], 64
          %v770 = vld [vmem:[%s769] sm:$0xff]
          %v771 = vld [vmem:[%s769 + $0x8] sm:$0xff]
          %v772 = vlaneseq
          %v773 = vshrl.u32 %v772, 7
          %v774 = vsub.s32 1, %v773
          %v775 = vrot.slane %v768, %v774
          %v776 = vmul.f32 %v775, %v770
          %v777 = vmul.f32 %v775, %v771
          %v778 = vadd.f32 %v762, %v776
          %v779 = vadd.f32 %v763, %v777
          %vm780 = vcmp.eq.s32.totalorder %v698, 5
          %v781 = vsel %vm780, %v696, 0.0
          %vm782 = vcmp.eq.s32.totalorder %v700, 5
          %v783 = vsel %vm782, %v695, 0.0
          %v784 = vadd.f32 %v781, %v783
          %s785 = scalar_lea.vmem [#allocation2], 80
          %v786 = vld [vmem:[%s785] sm:$0xff]
          %v787 = vld [vmem:[%s785 + $0x8] sm:$0xff]
          %v788 = vlaneseq
          %v789 = vshrl.u32 %v788, 7
          %v790 = vsub.s32 1, %v789
          %v791 = vrot.slane %v784, %v790
          %v792 = vmul.f32 %v791, %v786
          %v793 = vmul.f32 %v791, %v787
          %v794 = vadd.f32 %v778, %v792
          %v795 = vadd.f32 %v779, %v793
          %vm796 = vcmp.eq.s32.totalorder %v698, 6
          %v797 = vsel %vm796, %v696, 0.0
          %vm798 = vcmp.eq.s32.totalorder %v700, 6
          %v799 = vsel %vm798, %v695, 0.0
          %v800 = vadd.f32 %v797, %v799
          %s801 = scalar_lea.vmem [#allocation2], 96
          %v802 = vld [vmem:[%s801] sm:$0xff]
          %v803 = vld [vmem:[%s801 + $0x8] sm:$0xff]
          %v804 = vlaneseq
          %v805 = vshrl.u32 %v804, 7
          %v806 = vsub.s32 1, %v805
          %v807 = vrot.slane %v800, %v806
          %v808 = vmul.f32 %v807, %v802
          %v809 = vmul.f32 %v807, %v803
          %v810 = vadd.f32 %v794, %v808
          %v811 = vadd.f32 %v795, %v809
          %vm812 = vcmp.eq.s32.totalorder %v698, 7
          %v813 = vsel %vm812, %v696, 0.0
          %vm814 = vcmp.eq.s32.totalorder %v700, 7
          %v815 = vsel %vm814, %v695, 0.0
          %v816 = vadd.f32 %v813, %v815
          %s817 = scalar_lea.vmem [#allocation2], 112
          %v818 = vld [vmem:[%s817] sm:$0xff]
          %v819 = vld [vmem:[%s817 + $0x8] sm:$0xff]
          %v820 = vlaneseq
          %v821 = vshrl.u32 %v820, 7
          %v822 = vsub.s32 1, %v821
          %v823 = vrot.slane %v816, %v822
          %v824 = vmul.f32 %v823, %v818
          %v825 = vmul.f32 %v823, %v819
          %v826 = vadd.f32 %v810, %v824
          %v827 = vadd.f32 %v811, %v825
          %vm828 = vcmp.eq.s32.totalorder %v698, 8
          %v829 = vsel %vm828, %v696, 0.0
          %vm830 = vcmp.eq.s32.totalorder %v700, 8
          %v831 = vsel %vm830, %v695, 0.0
          %v832 = vadd.f32 %v829, %v831
          %s833 = scalar_lea.vmem [#allocation2], 128
          %v834 = vld [vmem:[%s833] sm:$0xff]
          %v835 = vld [vmem:[%s833 + $0x8] sm:$0xff]
          %v836 = vlaneseq
          %v837 = vshrl.u32 %v836, 7
          %v838 = vsub.s32 1, %v837
          %v839 = vrot.slane %v832, %v838
          %v840 = vmul.f32 %v839, %v834
          %v841 = vmul.f32 %v839, %v835
          %v842 = vadd.f32 %v826, %v840
          %v843 = vadd.f32 %v827, %v841
          %vm844 = vcmp.eq.s32.totalorder %v698, 9
          %v845 = vsel %vm844, %v696, 0.0
          %vm846 = vcmp.eq.s32.totalorder %v700, 9
          %v847 = vsel %vm846, %v695, 0.0
          %v848 = vadd.f32 %v845, %v847
          %s849 = scalar_lea.vmem [#allocation2], 144
          %v850 = vld [vmem:[%s849] sm:$0xff]
          %v851 = vld [vmem:[%s849 + $0x8] sm:$0xff]
          %v852 = vlaneseq
          %v853 = vshrl.u32 %v852, 7
          %v854 = vsub.s32 1, %v853
          %v855 = vrot.slane %v848, %v854
          %v856 = vmul.f32 %v855, %v850
          %v857 = vmul.f32 %v855, %v851
          %v858 = vadd.f32 %v842, %v856
          %v859 = vadd.f32 %v843, %v857
          %vm860 = vcmp.eq.s32.totalorder %v698, 10
          %v861 = vsel %vm860, %v696, 0.0
          %vm862 = vcmp.eq.s32.totalorder %v700, 10
          %v863 = vsel %vm862, %v695, 0.0
          %v864 = vadd.f32 %v861, %v863
          %s865 = scalar_lea.vmem [#allocation2], 160
          %v866 = vld [vmem:[%s865] sm:$0xff]
          %v867 = vld [vmem:[%s865 + $0x8] sm:$0xff]
          %v868 = vlaneseq
          %v869 = vshrl.u32 %v868, 7
          %v870 = vsub.s32 1, %v869
          %v871 = vrot.slane %v864, %v870
          %v872 = vmul.f32 %v871, %v866
          %v873 = vmul.f32 %v871, %v867
          %v874 = vadd.f32 %v858, %v872
          %v875 = vadd.f32 %v859, %v873
          %vm876 = vcmp.eq.s32.totalorder %v698, 11
          %v877 = vsel %vm876, %v696, 0.0
          %vm878 = vcmp.eq.s32.totalorder %v700, 11
          %v879 = vsel %vm878, %v695, 0.0
          %v880 = vadd.f32 %v877, %v879
          %s881 = scalar_lea.vmem [#allocation2], 176
          %v882 = vld [vmem:[%s881] sm:$0xff]
          %v883 = vld [vmem:[%s881 + $0x8] sm:$0xff]
          %v884 = vlaneseq
          %v885 = vshrl.u32 %v884, 7
          %v886 = vsub.s32 1, %v885
          %v887 = vrot.slane %v880, %v886
          %v888 = vmul.f32 %v887, %v882
          %v889 = vmul.f32 %v887, %v883
          %v890 = vadd.f32 %v874, %v888
          %v891 = vadd.f32 %v875, %v889
          %vm892 = vcmp.eq.s32.totalorder %v698, 12
          %v893 = vsel %vm892, %v696, 0.0
          %vm894 = vcmp.eq.s32.totalorder %v700, 12
          %v895 = vsel %vm894, %v695, 0.0
          %v896 = vadd.f32 %v893, %v895
          %s897 = scalar_lea.vmem [#allocation2], 192
          %v898 = vld [vmem:[%s897] sm:$0xff]
          %v899 = vld [vmem:[%s897 + $0x8] sm:$0xff]
          %v900 = vlaneseq
          %v901 = vshrl.u32 %v900, 7
          %v902 = vsub.s32 1, %v901
          %v903 = vrot.slane %v896, %v902
          %v904 = vmul.f32 %v903, %v898
          %v905 = vmul.f32 %v903, %v899
          %v906 = vadd.f32 %v890, %v904
          %v907 = vadd.f32 %v891, %v905
          %vm908 = vcmp.eq.s32.totalorder %v698, 13
          %v909 = vsel %vm908, %v696, 0.0
          %vm910 = vcmp.eq.s32.totalorder %v700, 13
          %v911 = vsel %vm910, %v695, 0.0
          %v912 = vadd.f32 %v909, %v911
          %s913 = scalar_lea.vmem [#allocation2], 208
          %v914 = vld [vmem:[%s913] sm:$0xff]
          %v915 = vld [vmem:[%s913 + $0x8] sm:$0xff]
          %v916 = vlaneseq
          %v917 = vshrl.u32 %v916, 7
          %v918 = vsub.s32 1, %v917
          %v919 = vrot.slane %v912, %v918
          %v920 = vmul.f32 %v919, %v914
          %v921 = vmul.f32 %v919, %v915
          %v922 = vadd.f32 %v906, %v920
          %v923 = vadd.f32 %v907, %v921
          %vm924 = vcmp.eq.s32.totalorder %v698, 14
          %v925 = vsel %vm924, %v696, 0.0
          %vm926 = vcmp.eq.s32.totalorder %v700, 14
          %v927 = vsel %vm926, %v695, 0.0
          %v928 = vadd.f32 %v925, %v927
          %s929 = scalar_lea.vmem [#allocation2], 224
          %v930 = vld [vmem:[%s929] sm:$0xff]
          %v931 = vld [vmem:[%s929 + $0x8] sm:$0xff]
          %v932 = vlaneseq
          %v933 = vshrl.u32 %v932, 7
          %v934 = vsub.s32 1, %v933
          %v935 = vrot.slane %v928, %v934
          %v936 = vmul.f32 %v935, %v930
          %v937 = vmul.f32 %v935, %v931
          %v938 = vadd.f32 %v922, %v936
          %v939 = vadd.f32 %v923, %v937
          %vm940 = vcmp.eq.s32.totalorder %v698, 15
          %v941 = vsel %vm940, %v696, 0.0
          %vm942 = vcmp.eq.s32.totalorder %v700, 15
          %v943 = vsel %vm942, %v695, 0.0
          %v944 = vadd.f32 %v941, %v943
          %s945 = scalar_lea.vmem [#allocation2], 240
          %v946 = vld [vmem:[%s945] sm:$0xff]
          %v947 = vld [vmem:[%s945 + $0x8] sm:$0xff]
          %v948 = vlaneseq
          %v949 = vshrl.u32 %v948, 7
          %v950 = vsub.s32 1, %v949
          %v951 = vrot.slane %v944, %v950
          %v952 = vmul.f32 %v951, %v946
          %v953 = vmul.f32 %v951, %v947
          %v954 = vadd.f32 %v938, %v952
          %v955 = vadd.f32 %v939, %v953
          %v956 = vlaneseq
          %v957 = vshrl.u32 %v956, 7
          %v958 = vsub.s32 0, %v957
          %v959 = vrot.slane %v697, %v958
          %vm960 = vcmp.eq.s32.totalorder %v640, %v959
          %vm961 = vcmp.eq.s32.totalorder %v641, %v959
          %v962 = vlaneseq
          %v963 = vshrl.u32 %v962, 7
          %v964 = vsub.s32 0, %v963
          %v965 = vrot.slane %v694, %v964
          %v966 = vsel %vm960, %v965, 0.0
          %v967 = vsel %vm961, %v965, 0.0
          %v968 = vlaneseq
          %v969 = vshrl.u32 %v968, 7
          %v970 = vsub.s32 0, %v969
          %v971 = vrot.slane %v699, %v970
          %vm972 = vcmp.eq.s32.totalorder %v640, %v971
          %vm973 = vcmp.eq.s32.totalorder %v641, %v971
          %v974 = vlaneseq
          %v975 = vshrl.u32 %v974, 7
          %v976 = vsub.s32 0, %v975
          %v977 = vrot.slane %v693, %v976
          %v978 = vsel %vm972, %v977, 0.0
          %v979 = vsel %vm973, %v977, 0.0
          %v980 = vadd.f32 %v966, %v978
          %v981 = vadd.f32 %v967, %v979
          %v982 = vmul.f32 %v954, %v980
          %v983 = vmul.f32 %v955, %v981
          %v984 = vadd.f32 %v982, %v983
          %v985 = vrot.slane %v984, 4
          %v986 = vadd.f32 %v984, %v985
          %v987 = vrot.slane %v986, 2
          %v988 = vadd.f32 %v986, %v987
          %v989 = vrot.slane %v988, 1
          %v990 = vadd.f32 %v988, %v989
          %s991 = scalar_lea.vmem %s337, %s643 [#allocation11]
          %v992 = vld [vmem:[%s991] sm:$0x1]
          %v993 = vadd.f32 %v992, %v990
          %994 = vst [vmem:[%s991] sm:$0x1] %v993
        $region61: #{tpu_custom_call.1} parent=35 // loop_footer
          %s647 = sadd.s32 1, %s643
        $region62: #{tpu_custom_call.1} parent=35 // loop_footer_branch
          %642 = sbr.rel target = $region58
        $region63: #{tpu_custom_call.1} parent=35 // loop_exit
          _
        %p995 = scmp.eq.s32.totalorder %s32, 1
        // Predicated region
        $region64: #{tpu_custom_call.1} parent=35 // pred_check
          %p996 = pneg %p995
        $region65: #{tpu_custom_call.1} parent=35 // pred_check_branch
          %998 = sbr.rel (%p996) target = $region67
        $region66: #{tpu_custom_call.1} parent=35 // pred_region
          %v999 = vld [vmem:[%s337] sm:$0xff]
          %v1000 = vmul.f32 %v999, 0.03125
          %1001 = vst [vmem:[%s337] sm:$0xff] %v1000
        $region67: #{tpu_custom_call.1} parent=35 // pred_fallthru
          _
        %s1002 = sand.u32 %s161, 1
        %s1003 = scalar_lea.sflag [#allocation5], %s1002
        %s1004 = sand.u32 %s161, 1
        %s1005 = smul.addr %s1004, 8
        %s1006 = scalar_lea.vmem [#allocation11], %s1005
        // Predicated region
        $region68: #{tpu_custom_call.1} parent=35 // pred_check
          %p1007 = pneg %p171
        $region69: #{tpu_custom_call.1} parent=35 // pred_check_branch
          %1009 = sbr.rel (%p1007) target = $region71
        $region70: #{tpu_custom_call.1} parent=35 // pred_region
          %s1011 = ssub.s32 128, 128
          %1012 = vsyncadd %s1003, %s1011
          %s1013 = smul.addr %s30, 2
          %s1014 = sadd.s32 %s31, %s1013
          %s1015 = smul.addr %s1014, 128
          %s1016 = scalar_lea.hbm %s4, %s1015
          %s1018 = sshll.u32 %s1006, 4
          %s1019 = int_to_ptr.vmem [resolvable:$true] %s1018
          %1021 = dma.vmem_to_hbm [thread:$0]  %s1019, 128, %s1016, %s1003
        $region71: #{tpu_custom_call.1} parent=35 // pred_fallthru
          _
      $region36: #{tpu_custom_call.1} parent=5 // pred_fallthru
        _
      %p1022 = scmp.le.s32.totalorder 2, %s20
      // Predicated region
      $region72: #{tpu_custom_call.1} parent=5 // pred_check
        %p1023 = pneg %p1022
      $region73: #{tpu_custom_call.1} parent=5 // pred_check_branch
        %1025 = sbr.rel (%p1023) target = $region75
      $region74: #{tpu_custom_call.1} parent=5 // pred_region
        %s1026 = ssub.s32 %s20, 2
        // Predicated region
        $region76: #{tpu_custom_call.1} parent=74 // pred_check
          %p1027 = pneg %p177
        $region77: #{tpu_custom_call.1} parent=74 // pred_check_branch
          %1029 = sbr.rel (%p1027) target = $region79
        $region78: #{tpu_custom_call.1} parent=74 // pred_region
          %s1030 = sand.u32 %s162, 1
          %s1031 = scalar_lea.sflag [#allocation5], %s1030
          %s1032 = sand.u32 %s162, 1
          %s1033 = smul.addr %s1032, 8
          %s1034 = scalar_lea.vmem [#allocation11], %s1033
          %1035 = dma.done %s1031, 128
        $region79: #{tpu_custom_call.1} parent=74 // pred_fallthru
          _
      $region75: #{tpu_custom_call.1} parent=5 // pred_fallthru
        _
    $region6: #{tpu_custom_call.1} parent=1 // loop_footer
      %s24 = sadd.s32 1, %s20
    $region7: #{tpu_custom_call.1} parent=1 // loop_footer_branch
      %19 = sbr.rel target = $region3
    $region8: #{tpu_custom_call.1} parent=1 // loop_exit
      _
    %1036 = vsyncpa [#allocation4], 1
    %s1037 = scalar_lea.sflag [#allocation4], 1
    %1038 = vsyncpa %s1037, 1
    %1039 = vsyncpa [#allocation9], 1
    %s1040 = scalar_lea.sflag [#allocation9], 1
    %1041 = vsyncpa %s1040, 1
    %1042 = vsyncpa [#allocation5], 1
    %s1043 = scalar_lea.sflag [#allocation5], 1
    %1044 = vsyncpa %s1043, 1
    %1045 = vsyncpa [#allocation6], 1
    %s1046 = scalar_lea.sflag [#allocation6], 1
    %1047 = vsyncpa %s1046, 1

</llo_original>
